<compile_context>
chip_gen: v7x
topology: tpu7x:2x2x1
jax: 0.10.0
libtpu: 0.0.40
codegen_flags: <defaults>
</compile_context>

<pallas_src>
import functools

import jax
import jax.numpy as jnp
from jax import lax
from jax.experimental import pallas as pl
from jax.experimental.pallas import tpu as pltpu


def _resblock_kernel(x_ref, fdown_ref, fup_ref, vecs_ref, w1_ref, w2_ref, o_ref,
                     *, GB, H, WC, eps):
    M = GB * H
    x = x_ref[...]                      # (GB*H, WC) lane-dense activations
    fdown = fdown_ref[...]              # (WC, G)  lane -> group one-hot
    fup = fup_ref[...]                  # (G, WC)  group -> lane, pre-divided by n
    vecs = vecs_ref[...]                # (8, WC)  packed per-channel vectors

    if GB > 1:                          # seam masks only needed when images are folded
        row = lax.broadcasted_iota(jnp.int32, (M, 1), 0)
        not_first = (row % H) != 0      # rows with a valid y-1 neighbour in-image
        not_last = (row % H) != (H - 1)
    zrow = jnp.zeros((1, WC), jnp.float32)

    def group_norm_relu(h, gamma, beta):
        # Per-image two-pass GroupNorm; lane/group aggregation via the rank-G
        # factorization of the old dense (WC, WC) aggregation matrix.
        outs = []
        for g in range(GB):
            hg = h[g * H:(g + 1) * H, :]                               # (H, WC)
            s = jnp.sum(hg, axis=0, keepdims=True)                     # (1, WC)
            mean = jnp.dot(
                jnp.dot(s, fdown, preferred_element_type=jnp.float32),
                fup, preferred_element_type=jnp.float32)               # (1, WC)
            d = hg - mean
            ss = jnp.sum(d * d, axis=0, keepdims=True)                 # (1, WC)
            var = jnp.dot(
                jnp.dot(ss, fdown, preferred_element_type=jnp.float32),
                fup, preferred_element_type=jnp.float32)
            inv = lax.rsqrt(var + eps)
            outs.append(jnp.maximum(d * (inv * gamma) + beta, 0.0))
        return outs[0] if GB == 1 else jnp.concatenate(outs, axis=0)

    def conv3x3(h, w_ref, bias):
        # dy taps as whole-row shifts (zero rows at image top/bottom and at
        # batch-fold seams); dx shift + channel contraction live in the
        # block-banded weights.  All three taps stacked along K -> one MXU dot.
        h_prev = jnp.concatenate([zrow, h[:M - 1, :]], axis=0)   # row y -> h[y-1]
        h_next = jnp.concatenate([h[1:, :], zrow], axis=0)       # row y -> h[y+1]
        if GB > 1:
            h_prev = jnp.where(not_first, h_prev, 0.0)
            h_next = jnp.where(not_last, h_next, 0.0)
        hcat = jnp.concatenate([h_prev, h, h_next], axis=1)      # (M, 3*WC)
        return jnp.dot(hcat, w_ref[...],
                       preferred_element_type=jnp.float32) + bias

    h = group_norm_relu(x, vecs[0:1], vecs[1:2])
    y = conv3x3(h, w1_ref, vecs[2:3])
    h = group_norm_relu(y, vecs[3:4], vecs[4:5])
    y = conv3x3(h, w2_ref, vecs[5:6])
    o_ref[...] = y + x                                           # residual


def prepare_resblock_params(params, H, W, C, *, groups=8):
    """One-time preprocessing: banded conv weights, GN factors, packed vectors."""
    WC = W * C
    Cg = C // groups
    n = float(H * W * Cg)

    gid = jnp.arange(C) // Cg
    onehot = (gid[:, None] == jnp.arange(groups)[None, :]).astype(jnp.float32)  # (C, G)
    fdown = jnp.tile(onehot, (W, 1))              # (WC, G)
    fup = jnp.tile(onehot.T, (1, W)) / n          # (G, WC), 1/n folded in

    def conv_to_stacked(w_oihw):
        # OIHW -> stacked block-banded (3*WC, WC): rows [kh*WC + x'*C + ci],
        # cols [x*C + co]; entry = w[co, ci, kh, kw] where x' = x + kw - 1.
        w_hwio = jnp.transpose(w_oihw, (2, 3, 1, 0)).astype(jnp.float32)  # (3,3,Ci,Co)
        mats = []
        for kh in range(3):
            m = jnp.zeros((WC, WC), jnp.float32)
            for kw in range(3):
                m = m + jnp.kron(jnp.eye(W, k=1 - kw, dtype=jnp.float32),
                                 w_hwio[kh, kw])
            mats.append(m)
        return jnp.concatenate(mats, axis=0)      # (3*WC, WC)

    def lane_vec(v):                              # per-channel (C,) -> (1, W*C)
        return jnp.tile(v.astype(jnp.float32), W).reshape(1, WC)

    vecs = jnp.concatenate([
        lane_vec(params["norm1_w"]), lane_vec(params["norm1_b"]),
        lane_vec(params["conv1_b"]),
        lane_vec(params["norm2_w"]), lane_vec(params["norm2_b"]),
        lane_vec(params["conv2_b"]),
        jnp.zeros((2, WC), jnp.float32),
    ], axis=0)                                    # (8, WC)

    return {"fdown": fdown, "fup": fup, "vecs": vecs,
            "w1": conv_to_stacked(params["conv1_w"]),
            "w2": conv_to_stacked(params["conv2_w"])}


@functools.partial(jax.jit, static_argnames=("groups", "eps"))
def res_block_pallas(x_nchw, prepped, *, groups=8, eps=1e-5):
    B, C, H, W = x_nchw.shape
    WC = W * C
    # NCHW -> lane-dense (B*H, W*C).  TODO(synk): callers chaining many ResBlocks
    # should keep activations in this layout between blocks to skip the two
    # transposes (an extra HBM round-trip of the activation) per block.
    x2d = jnp.transpose(x_nchw, (0, 2, 3, 1)).astype(jnp.float32).reshape(B * H, WC)

    nb = 2 if B % 2 == 0 else 1          # 2-wide parallel grid keeps both v7x TCs busy
    GB = B // nb                         # images folded into each matmul M block
    M = GB * H

    kernel = functools.partial(_resblock_kernel, GB=GB, H=H, WC=WC, eps=eps)
    img_spec = pl.BlockSpec((M, WC), lambda b: (b, 0))
    fdown_spec = pl.BlockSpec((WC, groups), lambda b: (0, 0))
    fup_spec = pl.BlockSpec((groups, WC), lambda b: (0, 0))
    vec_spec = pl.BlockSpec((8, WC), lambda b: (0, 0))
    wmat_spec = pl.BlockSpec((3 * WC, WC), lambda b: (0, 0))

    out = pl.pallas_call(
        kernel,
        out_shape=jax.ShapeDtypeStruct((B * H, WC), jnp.float32),
        grid_spec=pltpu.PrefetchScalarGridSpec(
            num_scalar_prefetch=0,
            grid=(nb,),
            in_specs=[img_spec, fdown_spec, fup_spec, vec_spec,
                      wmat_spec, wmat_spec],
            out_specs=img_spec),
        compiler_params=pltpu.CompilerParams(
            dimension_semantics=("parallel",)),
    )(x2d, prepped["fdown"], prepped["fup"], prepped["vecs"],
      prepped["w1"], prepped["w2"])

    out = out.reshape(B, H, W, C)
    return jnp.transpose(out, (0, 3, 1, 2))       # back to NCHW


def res_block_ref(x, params, *, groups=8, eps=1e-5):
    """Pure-JAX reference matching torch semantics (NCHW)."""
    def gn(h, g, b):
        B, C, H, W = h.shape
        hg = h.reshape(B, groups, C // groups, H, W)
        mean = hg.mean(axis=(2, 3, 4), keepdims=True)
        var = ((hg - mean) ** 2).mean(axis=(2, 3, 4), keepdims=True)
        hn = ((hg - mean) / jnp.sqrt(var + eps)).reshape(B, C, H, W)
        return hn * g[None, :, None, None] + b[None, :, None, None]

    def conv(h, w, b):
        y = lax.conv_general_dilated(h, w, (1, 1), "SAME",
                                     dimension_numbers=("NCHW", "OIHW", "NCHW"))
        return y + b[None, :, None, None]

    h = conv(jax.nn.relu(gn(x, params["norm1_w"], params["norm1_b"])),
             params["conv1_w"], params["conv1_b"])
    h = conv(jax.nn.relu(gn(h, params["norm2_w"], params["norm2_b"])),
             params["conv2_w"], params["conv2_b"])
    return h + x


if __name__ == "__main__":
    dim, B, H, W = 16, 2, 16, 16          # dim must be divisible by 8 (GroupNorm)
    key = jax.random.PRNGKey(0)
    ks = jax.random.split(key, 9)

    params = {
        "conv1_w": 0.1 * jax.random.normal(ks[0], (dim, dim, 3, 3), jnp.float32),
        "conv1_b": 0.1 * jax.random.normal(ks[1], (dim,), jnp.float32),
        "conv2_w": 0.1 * jax.random.normal(ks[2], (dim, dim, 3, 3), jnp.float32),
        "conv2_b": 0.1 * jax.random.normal(ks[3], (dim,), jnp.float32),
        "norm1_w": 1.0 + 0.1 * jax.random.normal(ks[4], (dim,), jnp.float32),
        "norm1_b": 0.1 * jax.random.normal(ks[5], (dim,), jnp.float32),
        "norm2_w": 1.0 + 0.1 * jax.random.normal(ks[6], (dim,), jnp.float32),
        "norm2_b": 0.1 * jax.random.normal(ks[7], (dim,), jnp.float32),
    }
    x = jax.random.normal(ks[8], (B, dim, H, W), jnp.float32)

    prepped = prepare_resblock_params(params, H, W, dim, groups=8)   # one-time
    out = jax.block_until_ready(res_block_pallas(x, prepped))
    ref = jax.block_until_ready(res_block_ref(x, params))

    assert out.shape == x.shape and out.dtype == jnp.float32
    assert jnp.allclose(out, ref, atol=1e-4, rtol=1e-4), \
        f"max abs err {jnp.max(jnp.abs(out - ref))}"
    print("KERNEL_OK")
</pallas_src>

<mosaic_0001>
module attributes {stable_mosaic.version = 11 : i64} {
  func.func @_resblock_kernel(%arg0: i32, %arg1: memref<16x256xf32, #tpu.memory_space<vmem>>, %arg2: memref<256x8xf32, #tpu.memory_space<vmem>>, %arg3: memref<8x256xf32, #tpu.memory_space<vmem>>, %arg4: memref<8x256xf32, #tpu.memory_space<vmem>>, %arg5: memref<768x256xf32, #tpu.memory_space<vmem>>, %arg6: memref<768x256xf32, #tpu.memory_space<vmem>>, %arg7: memref<16x256xf32, #tpu.memory_space<vmem>>) attributes {dimension_semantics = [#tpu.dimension_semantics<parallel>], iteration_bounds = array<i64: 2>, scalar_prefetch = 0 : i64, scratch_operands = 0 : i64, tpu.core_type = #tpu.core_type<tc>, window_params = [{transform_indices = @transform_0, window_bounds = array<i64: 16, 256>}, {pipeline_mode = #tpu.pipeline_mode<synchronous>, transform_indices = @transform_1, window_bounds = array<i64: 256, 8>}, {pipeline_mode = #tpu.pipeline_mode<synchronous>, transform_indices = @transform_2, window_bounds = array<i64: 8, 256>}, {pipeline_mode = #tpu.pipeline_mode<synchronous>, transform_indices = @transform_3, window_bounds = array<i64: 8, 256>}, {pipeline_mode = #tpu.pipeline_mode<synchronous>, transform_indices = @transform_4, window_bounds = array<i64: 768, 256>}, {pipeline_mode = #tpu.pipeline_mode<synchronous>, transform_indices = @transform_5, window_bounds = array<i64: 768, 256>}, {transform_indices = @transform_6, window_bounds = array<i64: 16, 256>}]} {
    %c0 = arith.constant 0 : index
    %c0_0 = arith.constant 0 : index
    %0 = vector.load %arg1[%c0, %c0_0] : memref<16x256xf32, #tpu.memory_space<vmem>>, vector<16x256xf32>
    %c0_1 = arith.constant 0 : index
    %c0_2 = arith.constant 0 : index
    %1 = vector.load %arg2[%c0_1, %c0_2] : memref<256x8xf32, #tpu.memory_space<vmem>>, vector<256x8xf32>
    %c0_3 = arith.constant 0 : index
    %c0_4 = arith.constant 0 : index
    %2 = vector.load %arg3[%c0_3, %c0_4] : memref<8x256xf32, #tpu.memory_space<vmem>>, vector<8x256xf32>
    %c0_5 = arith.constant 0 : index
    %c0_6 = arith.constant 0 : index
    %3 = vector.load %arg4[%c0_5, %c0_6] : memref<8x256xf32, #tpu.memory_space<vmem>>, vector<8x256xf32>
    %cst = arith.constant 0.000000e+00 : f32
    %4 = vector.broadcast %cst : f32 to vector<1x256xf32>
    %5 = vector.extract_strided_slice %3 {offsets = [0, 0], sizes = [1, 256], strides = [1, 1]} : vector<8x256xf32> to vector<1x256xf32>
    %6 = vector.extract_strided_slice %3 {offsets = [1, 0], sizes = [1, 256], strides = [1, 1]} : vector<8x256xf32> to vector<1x256xf32>
    %cst_7 = arith.constant dense<0.000000e+00> : vector<256xf32>
    %7 = vector.multi_reduction <add>, %0, %cst_7 [0] : vector<16x256xf32> to vector<256xf32>
    %8 = vector.shape_cast %7 : vector<256xf32> to vector<1x256xf32>
    %cst_8 = arith.constant dense<0.000000e+00> : vector<1x8xf32>
    %9 = tpu.matmul %8, %1, %cst_8 {dimension_numbers = #tpu.dot_dimension_numbers<[1], [0], [0], [1], [0, 0, 1, 1], [], []>} : vector<1x256xf32>, vector<256x8xf32>, vector<1x8xf32> -> vector<1x8xf32>
    %cst_9 = arith.constant dense<0.000000e+00> : vector<1x256xf32>
    %10 = tpu.matmul %9, %2, %cst_9 {dimension_numbers = #tpu.dot_dimension_numbers<[1], [0], [0], [1], [0, 0, 1, 1], [], []>} : vector<1x8xf32>, vector<8x256xf32>, vector<1x256xf32> -> vector<1x256xf32>
    %11 = vector.broadcast %10 : vector<1x256xf32> to vector<16x256xf32>
    %12 = arith.subf %0, %11 : vector<16x256xf32>
    %13 = arith.mulf %12, %12 : vector<16x256xf32>
    %cst_10 = arith.constant dense<0.000000e+00> : vector<256xf32>
    %14 = vector.multi_reduction <add>, %13, %cst_10 [0] : vector<16x256xf32> to vector<256xf32>
    %15 = vector.shape_cast %14 : vector<256xf32> to vector<1x256xf32>
    %cst_11 = arith.constant dense<0.000000e+00> : vector<1x8xf32>
    %16 = tpu.matmul %15, %1, %cst_11 {dimension_numbers = #tpu.dot_dimension_numbers<[1], [0], [0], [1], [0, 0, 1, 1], [], []>} : vector<1x256xf32>, vector<256x8xf32>, vector<1x8xf32> -> vector<1x8xf32>
    %cst_12 = arith.constant dense<0.000000e+00> : vector<1x256xf32>
    %17 = tpu.matmul %16, %2, %cst_12 {dimension_numbers = #tpu.dot_dimension_numbers<[1], [0], [0], [1], [0, 0, 1, 1], [], []>} : vector<1x8xf32>, vector<8x256xf32>, vector<1x256xf32> -> vector<1x256xf32>
    %cst_13 = arith.constant 9.99999974E-6 : f32
    %18 = vector.broadcast %cst_13 : f32 to vector<1x256xf32>
    %19 = arith.addf %17, %18 : vector<1x256xf32>
    %20 = math.rsqrt %19 : vector<1x256xf32>
    %21 = arith.mulf %20, %5 : vector<1x256xf32>
    %22 = vector.broadcast %21 : vector<1x256xf32> to vector<16x256xf32>
    %23 = arith.mulf %12, %22 : vector<16x256xf32>
    %24 = vector.broadcast %6 : vector<1x256xf32> to vector<16x256xf32>
    %25 = arith.addf %23, %24 : vector<16x256xf32>
    %cst_14 = arith.constant 0.000000e+00 : f32
    %26 = vector.broadcast %cst_14 : f32 to vector<16x256xf32>
    %27 = arith.maximumf %25, %26 : vector<16x256xf32>
    %28 = vector.extract_strided_slice %3 {offsets = [2, 0], sizes = [1, 256], strides = [1, 1]} : vector<8x256xf32> to vector<1x256xf32>
    %29 = vector.extract_strided_slice %27 {offsets = [0, 0], sizes = [15, 256], strides = [1, 1]} : vector<16x256xf32> to vector<15x256xf32>
    %30 = tpu.concatenate %4, %29 in 0 : vector<1x256xf32>, vector<15x256xf32> -> vector<16x256xf32>
    %31 = vector.extract_strided_slice %27 {offsets = [1, 0], sizes = [15, 256], strides = [1, 1]} : vector<16x256xf32> to vector<15x256xf32>
    %32 = tpu.concatenate %31, %4 in 0 : vector<15x256xf32>, vector<1x256xf32> -> vector<16x256xf32>
    %33 = tpu.concatenate %30, %27, %32 in 1 : vector<16x256xf32>, vector<16x256xf32>, vector<16x256xf32> -> vector<16x768xf32>
    %c0_15 = arith.constant 0 : index
    %c0_16 = arith.constant 0 : index
    %34 = vector.load %arg5[%c0_15, %c0_16] : memref<768x256xf32, #tpu.memory_space<vmem>>, vector<768x256xf32>
    %cst_17 = arith.constant dense<0.000000e+00> : vector<16x256xf32>
    %35 = tpu.matmul %33, %34, %cst_17 {dimension_numbers = #tpu.dot_dimension_numbers<[1], [0], [0], [1], [0, 0, 1, 1], [], []>} : vector<16x768xf32>, vector<768x256xf32>, vector<16x256xf32> -> vector<16x256xf32>
    %36 = vector.broadcast %28 : vector<1x256xf32> to vector<16x256xf32>
    %37 = arith.addf %35, %36 : vector<16x256xf32>
    %38 = vector.extract_strided_slice %3 {offsets = [3, 0], sizes = [1, 256], strides = [1, 1]} : vector<8x256xf32> to vector<1x256xf32>
    %39 = vector.extract_strided_slice %3 {offsets = [4, 0], sizes = [1, 256], strides = [1, 1]} : vector<8x256xf32> to vector<1x256xf32>
    %cst_18 = arith.constant dense<0.000000e+00> : vector<256xf32>
    %40 = vector.multi_reduction <add>, %37, %cst_18 [0] : vector<16x256xf32> to vector<256xf32>
    %41 = vector.shape_cast %40 : vector<256xf32> to vector<1x256xf32>
    %cst_19 = arith.constant dense<0.000000e+00> : vector<1x8xf32>
    %42 = tpu.matmul %41, %1, %cst_19 {dimension_numbers = #tpu.dot_dimension_numbers<[1], [0], [0], [1], [0, 0, 1, 1], [], []>} : vector<1x256xf32>, vector<256x8xf32>, vector<1x8xf32> -> vector<1x8xf32>
    %cst_20 = arith.constant dense<0.000000e+00> : vector<1x256xf32>
    %43 = tpu.matmul %42, %2, %cst_20 {dimension_numbers = #tpu.dot_dimension_numbers<[1], [0], [0], [1], [0, 0, 1, 1], [], []>} : vector<1x8xf32>, vector<8x256xf32>, vector<1x256xf32> -> vector<1x256xf32>
    %44 = vector.broadcast %43 : vector<1x256xf32> to vector<16x256xf32>
    %45 = arith.subf %37, %44 : vector<16x256xf32>
    %46 = arith.mulf %45, %45 : vector<16x256xf32>
    %cst_21 = arith.constant dense<0.000000e+00> : vector<256xf32>
    %47 = vector.multi_reduction <add>, %46, %cst_21 [0] : vector<16x256xf32> to vector<256xf32>
    %48 = vector.shape_cast %47 : vector<256xf32> to vector<1x256xf32>
    %cst_22 = arith.constant dense<0.000000e+00> : vector<1x8xf32>
    %49 = tpu.matmul %48, %1, %cst_22 {dimension_numbers = #tpu.dot_dimension_numbers<[1], [0], [0], [1], [0, 0, 1, 1], [], []>} : vector<1x256xf32>, vector<256x8xf32>, vector<1x8xf32> -> vector<1x8xf32>
    %cst_23 = arith.constant dense<0.000000e+00> : vector<1x256xf32>
    %50 = tpu.matmul %49, %2, %cst_23 {dimension_numbers = #tpu.dot_dimension_numbers<[1], [0], [0], [1], [0, 0, 1, 1], [], []>} : vector<1x8xf32>, vector<8x256xf32>, vector<1x256xf32> -> vector<1x256xf32>
    %cst_24 = arith.constant 9.99999974E-6 : f32
    %51 = vector.broadcast %cst_24 : f32 to vector<1x256xf32>
    %52 = arith.addf %50, %51 : vector<1x256xf32>
    %53 = math.rsqrt %52 : vector<1x256xf32>
    %54 = arith.mulf %53, %38 : vector<1x256xf32>
    %55 = vector.broadcast %54 : vector<1x256xf32> to vector<16x256xf32>
    %56 = arith.mulf %45, %55 : vector<16x256xf32>
    %57 = vector.broadcast %39 : vector<1x256xf32> to vector<16x256xf32>
    %58 = arith.addf %56, %57 : vector<16x256xf32>
    %cst_25 = arith.constant 0.000000e+00 : f32
    %59 = vector.broadcast %cst_25 : f32 to vector<16x256xf32>
    %60 = arith.maximumf %58, %59 : vector<16x256xf32>
    %61 = vector.extract_strided_slice %3 {offsets = [5, 0], sizes = [1, 256], strides = [1, 1]} : vector<8x256xf32> to vector<1x256xf32>
    %62 = vector.extract_strided_slice %60 {offsets = [0, 0], sizes = [15, 256], strides = [1, 1]} : vector<16x256xf32> to vector<15x256xf32>
    %63 = tpu.concatenate %4, %62 in 0 : vector<1x256xf32>, vector<15x256xf32> -> vector<16x256xf32>
    %64 = vector.extract_strided_slice %60 {offsets = [1, 0], sizes = [15, 256], strides = [1, 1]} : vector<16x256xf32> to vector<15x256xf32>
    %65 = tpu.concatenate %64, %4 in 0 : vector<15x256xf32>, vector<1x256xf32> -> vector<16x256xf32>
    %66 = tpu.concatenate %63, %60, %65 in 1 : vector<16x256xf32>, vector<16x256xf32>, vector<16x256xf32> -> vector<16x768xf32>
    %c0_26 = arith.constant 0 : index
    %c0_27 = arith.constant 0 : index
    %67 = vector.load %arg6[%c0_26, %c0_27] : memref<768x256xf32, #tpu.memory_space<vmem>>, vector<768x256xf32>
    %cst_28 = arith.constant dense<0.000000e+00> : vector<16x256xf32>
    %68 = tpu.matmul %66, %67, %cst_28 {dimension_numbers = #tpu.dot_dimension_numbers<[1], [0], [0], [1], [0, 0, 1, 1], [], []>} : vector<16x768xf32>, vector<768x256xf32>, vector<16x256xf32> -> vector<16x256xf32>
    %69 = vector.broadcast %61 : vector<1x256xf32> to vector<16x256xf32>
    %70 = arith.addf %68, %69 : vector<16x256xf32>
    %71 = arith.addf %70, %0 : vector<16x256xf32>
    %c0_29 = arith.constant 0 : index
    %c0_30 = arith.constant 0 : index
    %72 = vector.load %arg7[%c0_29, %c0_30] : memref<16x256xf32, #tpu.memory_space<vmem>>, vector<16x256xf32>
    tpu.vector_store %arg7[%c0_29, %c0_30], %71 {strides = array<i32>} : memref<16x256xf32, #tpu.memory_space<vmem>>, vector<16x256xf32>,
    return
  }
  func.func @transform_0(%arg0: i32) -> (i32, i32) {
    %c0_i32 = arith.constant 0 : i32
    %c0_i32_0 = arith.constant 0 : i32
    return %arg0, %c0_i32 : i32, i32
  }
  func.func @transform_1(%arg0: i32) -> (i32, i32) {
    %c0_i32 = arith.constant 0 : i32
    %c0_i32_0 = arith.constant 0 : i32
    %c0_i32_1 = arith.constant 0 : i32
    return %c0_i32, %c0_i32_0 : i32, i32
  }
  func.func @transform_2(%arg0: i32) -> (i32, i32) {
    %c0_i32 = arith.constant 0 : i32
    %c0_i32_0 = arith.constant 0 : i32
    %c0_i32_1 = arith.constant 0 : i32
    return %c0_i32, %c0_i32_0 : i32, i32
  }
  func.func @transform_3(%arg0: i32) -> (i32, i32) {
    %c0_i32 = arith.constant 0 : i32
    %c0_i32_0 = arith.constant 0 : i32
    %c0_i32_1 = arith.constant 0 : i32
    return %c0_i32, %c0_i32_0 : i32, i32
  }
  func.func @transform_4(%arg0: i32) -> (i32, i32) {
    %c0_i32 = arith.constant 0 : i32
    %c0_i32_0 = arith.constant 0 : i32
    %c0_i32_1 = arith.constant 0 : i32
    return %c0_i32, %c0_i32_0 : i32, i32
  }
  func.func @transform_5(%arg0: i32) -> (i32, i32) {
    %c0_i32 = arith.constant 0 : i32
    %c0_i32_0 = arith.constant 0 : i32
    %c0_i32_1 = arith.constant 0 : i32
    return %c0_i32, %c0_i32_0 : i32, i32
  }
  func.func @transform_6(%arg0: i32) -> (i32, i32) {
    %c0_i32 = arith.constant 0 : i32
    %c0_i32_0 = arith.constant 0 : i32
    return %arg0, %c0_i32 : i32, i32
  }
}

</mosaic_0001>

<llo_original>
// kernel: res_block_pallas.1
$region0: #{res_block_pallas.1}
  #allocation0 [shape = 'u32[]', space=smem, size = 0x4, offset = 0x4, fixed_abs, tag = 'smem constant byte address 0x4 - core index']
  #allocation1 [shape = 'u32[144,128]{1,0:T(1,128)}', space=vmem, size = 0x12000, scoped, tag = 'internal scratch']
  %s0 = inlined_call_operand.vmem [shape: f32[32,256], index: 0, kind: input, shape index: {}]
  %s1 = inlined_call_operand.vmem [shape: f32[256,8], index: 1, kind: input, shape index: {}]
  %s2 = inlined_call_operand.vmem [shape: f32[8,256], index: 2, kind: input, shape index: {}]
  %s3 = inlined_call_operand.vmem [shape: f32[8,256], index: 3, kind: input, shape index: {}]
  %s4 = inlined_call_operand.vmem [shape: f32[768,256], index: 4, kind: input, shape index: {}]
  %s5 = inlined_call_operand.hbm [shape: f32[768,256], index: 5, kind: input, shape index: {}]
  %s6 = inlined_call_operand.vmem [shape: f32[32,256], index: 6, kind: output, shape index: {}]
  %s7 = sld [smem:[#allocation0]]
  $region61: #{res_block_pallas.1} parent=0
    _
  %s9 = ssub.s32 1, %s7
  %s10 = scalar_select 0, %s9, %s7
  $region1: #{res_block_pallas.1} parent=0
    #allocation2 [shape = 'u8[786432]{0}', space=vmem, size = 0xc0000, scoped, tag = 'input window, operand 5, single buffered']
    #allocation3 [shape = 's32[2]{0}', space=sflag, size = 0x8, scoped, tag = 'scoped memory for res_block_pallas.1']
    %11 = vsyncpa [#allocation3], 0
    loop: start=0, step=1, limit=4
    $region2: #{res_block_pallas.1} parent=1 // loop_pre_header
      _
    $region3: #{res_block_pallas.1} parent=1 // loop_header
      %s13 = sphi 0, %s17
      %p14 = scmp.ge.s32.totalorder %s13, 4
      %s23 = sphi 0, %s25
      %s26 = sphi 0, %s23
      %s27 = sphi 0, %s26
      %s43 = sphi 0, %s27
      %s47 = sphi 0, %s47
      %s49 = sphi 0, %s47
      %s50 = sphi 0, %s49
      %s64 = sphi 0, %s50
      %s68 = sphi 0, %s68
      %s70 = sphi 0, %s68
      %s71 = sphi 0, %s70
      %s85 = sphi 0, %s71
      %s89 = sphi 0, %s89
      %s91 = sphi 0, %s89
      %s92 = sphi 0, %s91
      %s106 = sphi 0, %s92
      %s110 = sphi 0, %s110
      %s112 = sphi 0, %s110
      %s113 = sphi 0, %s112
      %s127 = sphi 0, %s113
      %s131 = sphi 0, %s131
      %s133 = sphi 0, %s131
      %s134 = sphi 0, %s133
      %s148 = sphi 0, %s134
      %s154 = sphi 0, %s156
      %s157 = sphi 0, %s154
      %s158 = sphi 0, %s157
      %s174 = sphi 0, %s158
    $region4: #{res_block_pallas.1} parent=1 // loop_header_branch
      %16 = sbr.rel (%p14) target = $region8
    $region5: #{res_block_pallas.1} parent=1 // loop_body
      %s18 = ssub.s32 %s13, 1
      %s19 = ssub.s32 %s13, 2
      %s20 = sadd.s32 %s13, 1
      %s21 = ssub.s32 %s13, %s20
      %p22 = scmp.eq.s32.totalorder %s21, 0
      %s24 = sadd.s32 %s23, 1
      %s25 = scalar_select %p22, %s23, %s24
      %p28 = pneg %p22
      %p29 = scmp.eq.s32.totalorder %s13, 1
      %p30 = por %p28, %p29
      %p31 = scmp.ne.s32.totalorder %s23, %s26
      %p32 = scmp.eq.s32.totalorder %s13, 0
      %p33 = por %p31, %p32
      %p34 = scmp.ne.s32.totalorder %s23, %s26
      %p35 = scmp.eq.s32.totalorder %s18, 1
      %p36 = por %p34, %p35
      %p37 = scmp.ne.s32.totalorder %s26, %s27
      %p38 = scmp.eq.s32.totalorder %s18, 0
      %p39 = por %p37, %p38
      %p40 = scmp.ne.s32.totalorder %s26, %s27
      %p41 = scmp.eq.s32.totalorder %s19, 1
      %p42 = por %p40, %p41
      %p44 = scmp.ne.s32.totalorder %s27, %s43
      %p45 = scmp.eq.s32.totalorder %s19, 0
      %p46 = por %p44, %p45
      %s48 = sadd.s32 %s47, 1
      %p51 = scmp.eq.s32.totalorder %s13, 1
      %p52 = scmp.ne.s32.totalorder %s47, %s49
      %p53 = scmp.eq.s32.totalorder %s13, 0
      %p54 = por %p52, %p53
      %p55 = scmp.ne.s32.totalorder %s47, %s49
      %p56 = scmp.eq.s32.totalorder %s18, 1
      %p57 = por %p55, %p56
      %p58 = scmp.ne.s32.totalorder %s49, %s50
      %p59 = scmp.eq.s32.totalorder %s18, 0
      %p60 = por %p58, %p59
      %p61 = scmp.ne.s32.totalorder %s49, %s50
      %p62 = scmp.eq.s32.totalorder %s19, 1
      %p63 = por %p61, %p62
      %p65 = scmp.ne.s32.totalorder %s50, %s64
      %p66 = scmp.eq.s32.totalorder %s19, 0
      %p67 = por %p65, %p66
      %s69 = sadd.s32 %s68, 1
      %p72 = scmp.eq.s32.totalorder %s13, 1
      %p73 = scmp.ne.s32.totalorder %s68, %s70
      %p74 = scmp.eq.s32.totalorder %s13, 0
      %p75 = por %p73, %p74
      %p76 = scmp.ne.s32.totalorder %s68, %s70
      %p77 = scmp.eq.s32.totalorder %s18, 1
      %p78 = por %p76, %p77
      %p79 = scmp.ne.s32.totalorder %s70, %s71
      %p80 = scmp.eq.s32.totalorder %s18, 0
      %p81 = por %p79, %p80
      %p82 = scmp.ne.s32.totalorder %s70, %s71
      %p83 = scmp.eq.s32.totalorder %s19, 1
      %p84 = por %p82, %p83
      %p86 = scmp.ne.s32.totalorder %s71, %s85
      %p87 = scmp.eq.s32.totalorder %s19, 0
      %p88 = por %p86, %p87
      %s90 = sadd.s32 %s89, 1
      %p93 = scmp.eq.s32.totalorder %s13, 1
      %p94 = scmp.ne.s32.totalorder %s89, %s91
      %p95 = scmp.eq.s32.totalorder %s13, 0
      %p96 = por %p94, %p95
      %p97 = scmp.ne.s32.totalorder %s89, %s91
      %p98 = scmp.eq.s32.totalorder %s18, 1
      %p99 = por %p97, %p98
      %p100 = scmp.ne.s32.totalorder %s91, %s92
      %p101 = scmp.eq.s32.totalorder %s18, 0
      %p102 = por %p100, %p101
      %p103 = scmp.ne.s32.totalorder %s91, %s92
      %p104 = scmp.eq.s32.totalorder %s19, 1
      %p105 = por %p103, %p104
      %p107 = scmp.ne.s32.totalorder %s92, %s106
      %p108 = scmp.eq.s32.totalorder %s19, 0
      %p109 = por %p107, %p108
      %s111 = sadd.s32 %s110, 1
      %p114 = scmp.eq.s32.totalorder %s13, 1
      %p115 = scmp.ne.s32.totalorder %s110, %s112
      %p116 = scmp.eq.s32.totalorder %s13, 0
      %p117 = por %p115, %p116
      %p118 = scmp.ne.s32.totalorder %s110, %s112
      %p119 = scmp.eq.s32.totalorder %s18, 1
      %p120 = por %p118, %p119
      %p121 = scmp.ne.s32.totalorder %s112, %s113
      %p122 = scmp.eq.s32.totalorder %s18, 0
      %p123 = por %p121, %p122
      %p124 = scmp.ne.s32.totalorder %s112, %s113
      %p125 = scmp.eq.s32.totalorder %s19, 1
      %p126 = por %p124, %p125
      %p128 = scmp.ne.s32.totalorder %s113, %s127
      %p129 = scmp.eq.s32.totalorder %s19, 0
      %p130 = por %p128, %p129
      %s132 = sadd.s32 %s131, 1
      %p135 = scmp.eq.s32.totalorder %s13, 1
      %p136 = scmp.ne.s32.totalorder %s131, %s133
      %p137 = scmp.eq.s32.totalorder %s13, 0
      %p138 = por %p136, %p137
      %p139 = scmp.ne.s32.totalorder %s131, %s133
      %p140 = scmp.eq.s32.totalorder %s18, 1
      %p141 = por %p139, %p140
      %p142 = scmp.ne.s32.totalorder %s133, %s134
      %p143 = scmp.eq.s32.totalorder %s18, 0
      %p144 = por %p142, %p143
      %p145 = scmp.ne.s32.totalorder %s133, %s134
      %p146 = scmp.eq.s32.totalorder %s19, 1
      %p147 = por %p145, %p146
      %p149 = scmp.ne.s32.totalorder %s134, %s148
      %p150 = scmp.eq.s32.totalorder %s19, 0
      %p151 = por %p149, %p150
      %s152 = ssub.s32 %s13, %s20
      %p153 = scmp.eq.s32.totalorder %s152, 0
      %s155 = sadd.s32 %s154, 1
      %s156 = scalar_select %p153, %s154, %s155
      %p159 = pneg %p153
      %p160 = scmp.eq.s32.totalorder %s13, 1
      %p161 = por %p159, %p160
      %p162 = scmp.ne.s32.totalorder %s154, %s157
      %p163 = scmp.eq.s32.totalorder %s13, 0
      %p164 = por %p162, %p163
      %p165 = scmp.ne.s32.totalorder %s154, %s157
      %p166 = scmp.eq.s32.totalorder %s18, 1
      %p167 = por %p165, %p166
      %p168 = scmp.ne.s32.totalorder %s157, %s158
      %p169 = scmp.eq.s32.totalorder %s18, 0
      %p170 = por %p168, %p169
      %p171 = scmp.ne.s32.totalorder %s157, %s158
      %p172 = scmp.eq.s32.totalorder %s19, 1
      %p173 = por %p171, %p172
      %p175 = scmp.ne.s32.totalorder %s158, %s174
      %p176 = scmp.eq.s32.totalorder %s19, 0
      %p177 = por %p175, %p176
      %p178 = scmp.le.s32.totalorder 1, %s13
      %p179 = scmp.lt.s32.totalorder %s13, 3
      %p180 = pnand %p178, %p179
      %p181 = pneg %p180
      // Predicated region
      $region9: #{res_block_pallas.1} parent=5 // pred_check
        _
      $region10: #{res_block_pallas.1} parent=5 // pred_check_branch
        %183 = sbr.rel (%p180) target = $region12
      $region11: #{res_block_pallas.1} parent=5 // pred_region
        %s184 = ssub.s32 %s13, 1
        // Predicated region
        $region13: #{res_block_pallas.1} parent=11 // pred_check
          %p185 = pneg %p60
        $region14: #{res_block_pallas.1} parent=11 // pred_check_branch
          %187 = sbr.rel (%p185) target = $region16
        $region15: #{res_block_pallas.1} parent=11 // pred_region
          _
        $region16: #{res_block_pallas.1} parent=11 // pred_fallthru
          _
        // Predicated region
        $region17: #{res_block_pallas.1} parent=11 // pred_check
          %p188 = pneg %p81
        $region18: #{res_block_pallas.1} parent=11 // pred_check_branch
          %190 = sbr.rel (%p188) target = $region20
        $region19: #{res_block_pallas.1} parent=11 // pred_region
          _
        $region20: #{res_block_pallas.1} parent=11 // pred_fallthru
          _
        // Predicated region
        $region21: #{res_block_pallas.1} parent=11 // pred_check
          %p191 = pneg %p102
        $region22: #{res_block_pallas.1} parent=11 // pred_check_branch
          %193 = sbr.rel (%p191) target = $region24
        $region23: #{res_block_pallas.1} parent=11 // pred_region
          _
        $region24: #{res_block_pallas.1} parent=11 // pred_fallthru
          _
        // Predicated region
        $region25: #{res_block_pallas.1} parent=11 // pred_check
          %p194 = pneg %p123
        $region26: #{res_block_pallas.1} parent=11 // pred_check_branch
          %196 = sbr.rel (%p194) target = $region28
        $region27: #{res_block_pallas.1} parent=11 // pred_region
          _
        $region28: #{res_block_pallas.1} parent=11 // pred_fallthru
          _
        // Predicated region
        $region29: #{res_block_pallas.1} parent=11 // pred_check
          %p197 = pneg %p144
        $region30: #{res_block_pallas.1} parent=11 // pred_check_branch
          %199 = sbr.rel (%p197) target = $region32
        $region31: #{res_block_pallas.1} parent=11 // pred_region
          %s201 = ssub.s32 24576, 24576
          %202 = vsyncadd [#allocation3], %s201
          %s203 = sshll.u32 [#allocation2], 4
          %s204 = int_to_ptr.vmem [resolvable:$true] %s203
          %209 = dma.hbm_to_vmem [thread:$0]  %s5, 24576, %s204, [#allocation3], 256, 256, 16
        $region32: #{res_block_pallas.1} parent=11 // pred_fallthru
          _
      $region12: #{res_block_pallas.1} parent=5 // pred_fallthru
        _
      %p210 = scmp.lt.s32.totalorder %s13, 2
      // Predicated region
      $region33: #{res_block_pallas.1} parent=5 // pred_check
        %p211 = pneg %p210
      $region34: #{res_block_pallas.1} parent=5 // pred_check_branch
        %213 = sbr.rel (%p211) target = $region36
      $region35: #{res_block_pallas.1} parent=5 // pred_region
        // Predicated region
        $region37: #{res_block_pallas.1} parent=35 // pred_check
          %p214 = pneg %p33
        $region38: #{res_block_pallas.1} parent=35 // pred_check_branch
          %216 = sbr.rel (%p214) target = $region40
        $region39: #{res_block_pallas.1} parent=35 // pred_region
          %s217 = smul.u32 2, %s13
          %p218 = scmp.lt.s32.totalorder %s217, 3
          %s219 = scalar_select %p218, %s217, 3
          %s220 = smul.addr %s219, 2
          %s221 = smul.addr %s220, 8
          %s222 = scalar_lea.vmem %s0, %s221
          %s223 = smul.u32 2, %s13
        $region40: #{res_block_pallas.1} parent=35 // pred_fallthru
          _
      $region36: #{res_block_pallas.1} parent=5 // pred_fallthru
        _
      %p224 = scmp.le.s32.totalorder 1, %s13
      %p225 = scmp.lt.s32.totalorder %s13, 3
      %p226 = pnand %p224, %p225
      %p227 = pneg %p226
      // Predicated region
      $region41: #{res_block_pallas.1} parent=5 // pred_check
        _
      $region42: #{res_block_pallas.1} parent=5 // pred_check_branch
        %229 = sbr.rel (%p226) target = $region44
      $region43: #{res_block_pallas.1} parent=5 // pred_region
        %s230 = ssub.s32 %s13, 1
        // Predicated region
        $region45: #{res_block_pallas.1} parent=43 // pred_check
          %p231 = pneg %p144
        $region46: #{res_block_pallas.1} parent=43 // pred_check_branch
          %233 = sbr.rel (%p231) target = $region48
        $region47: #{res_block_pallas.1} parent=43 // pred_region
          %234 = dma.done [#allocation3], 24576
        $region48: #{res_block_pallas.1} parent=43 // pred_fallthru
          _
        %s235 = smul.u32 2, %s18
        %p236 = scmp.lt.s32.totalorder %s235, 3
        %s237 = scalar_select %p236, %s235, 3
        %s238 = smul.addr %s237, 2
        %s239 = smul.addr %s238, 8
        %s240 = scalar_lea.vmem %s0, %s239
        %p241 = pneg %p39
        %p242 = pneg %p36
        %p243 = pneg %p60
        %p244 = pneg %p57
        %p245 = pneg %p81
        %p246 = pneg %p78
        %p247 = pneg %p102
        %p248 = pneg %p99
        %p249 = pneg %p123
        %p250 = pneg %p120
        %p251 = pneg %p144
        %p252 = pneg %p141
        %p253 = pneg %p170
        %p254 = pneg %p167
        %s255 = smul.u32 2, %s18
        %p256 = scmp.lt.s32.totalorder %s255, 3
        %s257 = scalar_select %p256, %s255, 3
        %s258 = smul.addr %s257, 2
        %s259 = smul.addr %s258, 8
        %s260 = scalar_lea.vmem %s6, %s259
        %s261 = smul.u32 2, %s18
        %p262 = scmp.lt.s32.totalorder %s261, 3
        %s263 = scalar_select %p262, %s261, 3
        %s264 = smul.addr %s263, 2
        %s265 = smul.addr %s264, 8
        %s266 = scalar_lea.vmem %s0, %s265
        %s267 = smul.u32 2, %s18
        %s268 = smul.u32 2, %s18
        %p269 = scmp.lt.s32.totalorder %s268, 3
        %s270 = scalar_select %p269, %s268, 3
        %s271 = smul.addr %s270, 2
        %s272 = smul.addr %s271, 8
        %s273 = scalar_lea.vmem %s6, %s272
        %s274 = smul.u32 2, %s18
        %v275 = vld [vmem:[%s266] sm:$0xff]
        %v276 = vld [vmem:[%s266 + $0x8] sm:$0xff]
        %v277 = vld [vmem:[%s266 + $0x10] sm:$0xff]
        %v278 = vld [vmem:[%s266 + $0x18] sm:$0xff]
        %v279 = vld [vmem:[%s1] sm:$0xff]
        %v280 = vld [vmem:[%s1 + $0x8] sm:$0xff]
        %v281 = vld [vmem:[%s1 + $0x10] sm:$0xff]
        %v282 = vld [vmem:[%s1 + $0x18] sm:$0xff]
        %v283 = vld [vmem:[%s1 + $0x20] sm:$0xff]
        %v284 = vld [vmem:[%s1 + $0x28] sm:$0xff]
        %v285 = vld [vmem:[%s1 + $0x30] sm:$0xff]
        %v286 = vld [vmem:[%s1 + $0x38] sm:$0xff]
        %v287 = vld [vmem:[%s1 + $0x40] sm:$0xff]
        %v288 = vld [vmem:[%s1 + $0x48] sm:$0xff]
        %v289 = vld [vmem:[%s1 + $0x50] sm:$0xff]
        %v290 = vld [vmem:[%s1 + $0x58] sm:$0xff]
        %v291 = vld [vmem:[%s1 + $0x60] sm:$0xff]
        %v292 = vld [vmem:[%s1 + $0x68] sm:$0xff]
        %v293 = vld [vmem:[%s1 + $0x70] sm:$0xff]
        %v294 = vld [vmem:[%s1 + $0x78] sm:$0xff]
        %v295 = vld [vmem:[%s1 + $0x80] sm:$0xff]
        %v296 = vld [vmem:[%s1 + $0x88] sm:$0xff]
        %v297 = vld [vmem:[%s1 + $0x90] sm:$0xff]
        %v298 = vld [vmem:[%s1 + $0x98] sm:$0xff]
        %v299 = vld [vmem:[%s1 + $0xa0] sm:$0xff]
        %v300 = vld [vmem:[%s1 + $0xa8] sm:$0xff]
        %v301 = vld [vmem:[%s1 + $0xb0] sm:$0xff]
        %v302 = vld [vmem:[%s1 + $0xb8] sm:$0xff]
        %v303 = vld [vmem:[%s1 + $0xc0] sm:$0xff]
        %v304 = vld [vmem:[%s1 + $0xc8] sm:$0xff]
        %v305 = vld [vmem:[%s1 + $0xd0] sm:$0xff]
        %v306 = vld [vmem:[%s1 + $0xd8] sm:$0xff]
        %v307 = vld [vmem:[%s1 + $0xe0] sm:$0xff]
        %v308 = vld [vmem:[%s1 + $0xe8] sm:$0xff]
        %v309 = vld [vmem:[%s1 + $0xf0] sm:$0xff]
        %v310 = vld [vmem:[%s1 + $0xf8] sm:$0xff]
        %v311 = vld [vmem:[%s2] sm:$0xff]
        %v312 = vld [vmem:[%s2 + $0x8] sm:$0xff]
        %v313 = vld [vmem:[%s3] sm:$0xff]
        %v314 = vld [vmem:[%s3 + $0x8] sm:$0xff]
        %v315 = vadd.f32 %v275, %v277
        %v316 = vrot.slane %v315, 4
        %v317 = vadd.f32 %v315, %v316
        %v318 = vrot.slane %v317, 2
        %v319 = vadd.f32 %v317, %v318
        %v320 = vrot.slane %v319, 1
        %v321 = vadd.f32 %v319, %v320
        %v322 = vadd.f32 %v276, %v278
        %v323 = vrot.slane %v322, 4
        %v324 = vadd.f32 %v322, %v323
        %v325 = vrot.slane %v324, 2
        %v326 = vadd.f32 %v324, %v325
        %v327 = vrot.slane %v326, 1
        %v328 = vadd.f32 %v326, %v327
        %329 = vmatprep.subr.mxu0 0.0
        %330 = vmatpush1.msra.mxu0 %v279
        %331 = vmatprep.subr.mxu0 0.0
        %332 = vmatpush1.msra.mxu0 %v280
        %333 = vmatprep.subr.mxu0 0.0
        %334 = vmatpush1.msra.mxu0 %v281
        %335 = vmatprep.subr.mxu0 0.0
        %336 = vmatpush1.msra.mxu0 %v282
        %337 = vmatprep.subr.mxu0 0.0
        %338 = vmatpush1.msra.mxu0 %v283
        %339 = vmatprep.subr.mxu0 0.0
        %340 = vmatpush1.msra.mxu0 %v284
        %341 = vmatprep.subr.mxu0 0.0
        %342 = vmatpush1.msra.mxu0 %v285
        %343 = vmatprep.subr.mxu0 0.0
        %344 = vmatpush1.msra.mxu0 %v286
        %345 = vmatprep.subr.mxu0 0.0
        %346 = vmatpush1.msra.mxu0 %v287
        %347 = vmatprep.subr.mxu0 0.0
        %348 = vmatpush1.msra.mxu0 %v288
        %349 = vmatprep.subr.mxu0 0.0
        %350 = vmatpush1.msra.mxu0 %v289
        %351 = vmatprep.subr.mxu0 0.0
        %352 = vmatpush1.msra.mxu0 %v290
        %353 = vmatprep.subr.mxu0 0.0
        %354 = vmatpush1.msra.mxu0 %v291
        %355 = vmatprep.subr.mxu0 0.0
        %356 = vmatpush1.msra.mxu0 %v292
        %357 = vmatprep.subr.mxu0 0.0
        %358 = vmatpush1.msra.mxu0 %v293
        %359 = vmatprep.subr.mxu0 0.0
        %360 = vmatpush1.msra.mxu0 %v294
        %361 = vmatprep.subr.mxu0 0.0
        %362 = vmatpush1.msra.mxu0 %v295
        %363 = vmatprep.subr.mxu0 0.0
        %364 = vmatpush1.msra.mxu0 %v296
        %365 = vmatprep.subr.mxu0 0.0
        %366 = vmatpush1.msra.mxu0 %v297
        %367 = vmatprep.subr.mxu0 0.0
        %368 = vmatpush1.msra.mxu0 %v298
        %369 = vmatprep.subr.mxu0 0.0
        %370 = vmatpush1.msra.mxu0 %v299
        %371 = vmatprep.subr.mxu0 0.0
        %372 = vmatpush1.msra.mxu0 %v300
        %373 = vmatprep.subr.mxu0 0.0
        %374 = vmatpush1.msra.mxu0 %v301
        %375 = vmatprep.subr.mxu0 0.0
        %376 = vmatpush1.msra.mxu0 %v302
        %377 = vmatprep.subr.mxu0 0.0
        %378 = vmatpush1.msra.mxu0 %v303
        %379 = vmatprep.subr.mxu0 0.0
        %380 = vmatpush1.msra.mxu0 %v304
        %381 = vmatprep.subr.mxu0 0.0
        %382 = vmatpush1.msra.mxu0 %v305
        %383 = vmatprep.subr.mxu0 0.0
        %384 = vmatpush1.msra.mxu0 %v306
        %385 = vmatprep.subr.mxu0 0.0
        %386 = vmatpush1.msra.mxu0 %v307
        %387 = vmatprep.subr.mxu0 0.0
        %388 = vmatpush1.msra.mxu0 %v308
        %389 = vmatprep.subr.mxu0 0.0
        %390 = vmatpush1.msra.mxu0 %v309
        %391 = vmatprep.subr.mxu0 0.0
        %392 = vmatpush1.msra.mxu0 %v310
        %393 = vmatprep.mubr.f32.mxu0 %v328
        %394 = vmatmul.mubr.f32.gmra.mrb[0].mxu0 %v321
        %v395 = vpop.f32.mrb[0].mxu0
        %v396 = vadd.f32 0.0, %v395
        %v397 = vpop.f32.mrb[0].mxu0
        %398 = vdwg.mxu0
        %vm399 = vcmask 64512
        %v401 = vsel %vm399, %v396, 0
        %403 = vmatprep.subr.mxu0 %v312
        %404 = vmatpush1.msra.mxu0 %v311
        %405 = vmatprep.subr.mxu0 0.0
        %406 = vmatpush1.msra.mxu0 0.0
        %407 = vmatprep.subr.mxu0 0.0
        %408 = vmatpush1.msra.mxu0 0.0
        %409 = vmatprep.subr.mxu0 0.0
        %410 = vmatpush1.msra.mxu0 0.0
        %411 = vmatprep.subr.mxu0 0.0
        %412 = vmatpush1.msra.mxu0 0.0
        %413 = vmatprep.subr.mxu0 0.0
        %414 = vmatpush1.msra.mxu0 0.0
        %415 = vmatprep.subr.mxu0 0.0
        %416 = vmatpush1.msra.mxu0 0.0
        %417 = vmatprep.subr.mxu0 0.0
        %418 = vmatpush1.msra.mxu0 0.0
        %419 = vmatprep.subr.mxu0 0.0
        %420 = vmatpush1.msra.mxu0 0.0
        %421 = vmatprep.subr.mxu0 0.0
        %422 = vmatpush1.msra.mxu0 0.0
        %423 = vmatprep.subr.mxu0 0.0
        %424 = vmatpush1.msra.mxu0 0.0
        %425 = vmatprep.subr.mxu0 0.0
        %426 = vmatpush1.msra.mxu0 0.0
        %427 = vmatprep.subr.mxu0 0.0
        %428 = vmatpush1.msra.mxu0 0.0
        %429 = vmatprep.subr.mxu0 0.0
        %430 = vmatpush1.msra.mxu0 0.0
        %431 = vmatprep.subr.mxu0 0.0
        %432 = vmatpush1.msra.mxu0 0.0
        %433 = vmatprep.subr.mxu0 0.0
        %434 = vmatpush1.msra.mxu0 0.0
        %435 = vmatprep.subr.mxu0 0.0
        %436 = vmatpush1.msra.mxu0 0.0
        %437 = vmatprep.subr.mxu0 0.0
        %438 = vmatpush1.msra.mxu0 0.0
        %439 = vmatprep.subr.mxu0 0.0
        %440 = vmatpush1.msra.mxu0 0.0
        %441 = vmatprep.subr.mxu0 0.0
        %442 = vmatpush1.msra.mxu0 0.0
        %443 = vmatprep.subr.mxu0 0.0
        %444 = vmatpush1.msra.mxu0 0.0
        %445 = vmatprep.subr.mxu0 0.0
        %446 = vmatpush1.msra.mxu0 0.0
        %447 = vmatprep.subr.mxu0 0.0
        %448 = vmatpush1.msra.mxu0 0.0
        %449 = vmatprep.subr.mxu0 0.0
        %450 = vmatpush1.msra.mxu0 0.0
        %451 = vmatprep.subr.mxu0 0.0
        %452 = vmatpush1.msra.mxu0 0.0
        %453 = vmatprep.subr.mxu0 0.0
        %454 = vmatpush1.msra.mxu0 0.0
        %455 = vmatprep.subr.mxu0 0.0
        %456 = vmatpush1.msra.mxu0 0.0
        %457 = vmatprep.subr.mxu0 0.0
        %458 = vmatpush1.msra.mxu0 0.0
        %459 = vmatprep.subr.mxu0 0.0
        %460 = vmatpush1.msra.mxu0 0.0
        %461 = vmatprep.subr.mxu0 0.0
        %462 = vmatpush1.msra.mxu0 0.0
        %463 = vmatprep.subr.mxu0 0.0
        %464 = vmatpush1.msra.mxu0 0.0
        %465 = vmatprep.subr.mxu0 0.0
        %466 = vmatpush1.msra.mxu0 0.0
        %467 = vmatprep.mubr.f32.mxu0 0.0
        %468 = vmatmul.mubr.f32.gmra.mrb[0].mxu0 %v401
        %v469 = vpop.f32.mrb[0].mxu0
        %v470 = vadd.f32 0.0, %v469
        %v471 = vpop.f32.mrb[0].mxu0
        %v472 = vadd.f32 0.0, %v471
        %473 = vdwg.mxu0
        %v474 = vlaneseq
        %v475 = vshrl.u32 %v474, 7
        %v476 = vsub.s32 0, %v475
        %v477 = vrot.slane %v470, %v476
        %v478 = vlaneseq
        %v479 = vshrl.u32 %v478, 7
        %v480 = vsub.s32 0, %v479
        %v481 = vrot.slane %v472, %v480
        %v482 = vsub.f32 %v275, %v477
        %v483 = vsub.f32 %v276, %v481
        %v484 = vsub.f32 %v277, %v477
        %v485 = vsub.f32 %v278, %v481
        %v486 = vmul.f32 %v482, %v482
        %v487 = vmul.f32 %v483, %v483
        %v488 = vmul.f32 %v484, %v484
        %v489 = vmul.f32 %v485, %v485
        %v490 = vadd.f32 %v486, %v488
        %v491 = vrot.slane %v490, 4
        %v492 = vadd.f32 %v490, %v491
        %v493 = vrot.slane %v492, 2
        %v494 = vadd.f32 %v492, %v493
        %v495 = vrot.slane %v494, 1
        %v496 = vadd.f32 %v494, %v495
        %v497 = vadd.f32 %v487, %v489
        %v498 = vrot.slane %v497, 4
        %v499 = vadd.f32 %v497, %v498
        %v500 = vrot.slane %v499, 2
        %v501 = vadd.f32 %v499, %v500
        %v502 = vrot.slane %v501, 1
        %v503 = vadd.f32 %v501, %v502
        %504 = vmatprep.subr.mxu0 0.0
        %505 = vmatpush1.msra.mxu0 %v279
        %506 = vmatprep.subr.mxu0 0.0
        %507 = vmatpush1.msra.mxu0 %v280
        %508 = vmatprep.subr.mxu0 0.0
        %509 = vmatpush1.msra.mxu0 %v281
        %510 = vmatprep.subr.mxu0 0.0
        %511 = vmatpush1.msra.mxu0 %v282
        %512 = vmatprep.subr.mxu0 0.0
        %513 = vmatpush1.msra.mxu0 %v283
        %514 = vmatprep.subr.mxu0 0.0
        %515 = vmatpush1.msra.mxu0 %v284
        %516 = vmatprep.subr.mxu0 0.0
        %517 = vmatpush1.msra.mxu0 %v285
        %518 = vmatprep.subr.mxu0 0.0
        %519 = vmatpush1.msra.mxu0 %v286
        %520 = vmatprep.subr.mxu0 0.0
        %521 = vmatpush1.msra.mxu0 %v287
        %522 = vmatprep.subr.mxu0 0.0
        %523 = vmatpush1.msra.mxu0 %v288
        %524 = vmatprep.subr.mxu0 0.0
        %525 = vmatpush1.msra.mxu0 %v289
        %526 = vmatprep.subr.mxu0 0.0
        %527 = vmatpush1.msra.mxu0 %v290
        %528 = vmatprep.subr.mxu0 0.0
        %529 = vmatpush1.msra.mxu0 %v291
        %530 = vmatprep.subr.mxu0 0.0
        %531 = vmatpush1.msra.mxu0 %v292
        %532 = vmatprep.subr.mxu0 0.0
        %533 = vmatpush1.msra.mxu0 %v293
        %534 = vmatprep.subr.mxu0 0.0
        %535 = vmatpush1.msra.mxu0 %v294
        %536 = vmatprep.subr.mxu0 0.0
        %537 = vmatpush1.msra.mxu0 %v295
        %538 = vmatprep.subr.mxu0 0.0
        %539 = vmatpush1.msra.mxu0 %v296
        %540 = vmatprep.subr.mxu0 0.0
        %541 = vmatpush1.msra.mxu0 %v297
        %542 = vmatprep.subr.mxu0 0.0
        %543 = vmatpush1.msra.mxu0 %v298
        %544 = vmatprep.subr.mxu0 0.0
        %545 = vmatpush1.msra.mxu0 %v299
        %546 = vmatprep.subr.mxu0 0.0
        %547 = vmatpush1.msra.mxu0 %v300
        %548 = vmatprep.subr.mxu0 0.0
        %549 = vmatpush1.msra.mxu0 %v301
        %550 = vmatprep.subr.mxu0 0.0
        %551 = vmatpush1.msra.mxu0 %v302
        %552 = vmatprep.subr.mxu0 0.0
        %553 = vmatpush1.msra.mxu0 %v303
        %554 = vmatprep.subr.mxu0 0.0
        %555 = vmatpush1.msra.mxu0 %v304
        %556 = vmatprep.subr.mxu0 0.0
        %557 = vmatpush1.msra.mxu0 %v305
        %558 = vmatprep.subr.mxu0 0.0
        %559 = vmatpush1.msra.mxu0 %v306
        %560 = vmatprep.subr.mxu0 0.0
        %561 = vmatpush1.msra.mxu0 %v307
        %562 = vmatprep.subr.mxu0 0.0
        %563 = vmatpush1.msra.mxu0 %v308
        %564 = vmatprep.subr.mxu0 0.0
        %565 = vmatpush1.msra.mxu0 %v309
        %566 = vmatprep.subr.mxu0 0.0
        %567 = vmatpush1.msra.mxu0 %v310
        %568 = vmatprep.mubr.f32.mxu0 %v503
        %569 = vmatmul.mubr.f32.gmra.mrb[0].mxu0 %v496
        %v570 = vpop.f32.mrb[0].mxu0
        %v571 = vadd.f32 0.0, %v570
        %v572 = vpop.f32.mrb[0].mxu0
        %573 = vdwg.mxu0
        %v575 = vsel %vm399, %v571, 0
        %577 = vmatprep.subr.mxu0 %v312
        %578 = vmatpush1.msra.mxu0 %v311
        %579 = vmatprep.subr.mxu0 0.0
        %580 = vmatpush1.msra.mxu0 0.0
        %581 = vmatprep.subr.mxu0 0.0
        %582 = vmatpush1.msra.mxu0 0.0
        %583 = vmatprep.subr.mxu0 0.0
        %584 = vmatpush1.msra.mxu0 0.0
        %585 = vmatprep.subr.mxu0 0.0
        %586 = vmatpush1.msra.mxu0 0.0
        %587 = vmatprep.subr.mxu0 0.0
        %588 = vmatpush1.msra.mxu0 0.0
        %589 = vmatprep.subr.mxu0 0.0
        %590 = vmatpush1.msra.mxu0 0.0
        %591 = vmatprep.subr.mxu0 0.0
        %592 = vmatpush1.msra.mxu0 0.0
        %593 = vmatprep.subr.mxu0 0.0
        %594 = vmatpush1.msra.mxu0 0.0
        %595 = vmatprep.subr.mxu0 0.0
        %596 = vmatpush1.msra.mxu0 0.0
        %597 = vmatprep.subr.mxu0 0.0
        %598 = vmatpush1.msra.mxu0 0.0
        %599 = vmatprep.subr.mxu0 0.0
        %600 = vmatpush1.msra.mxu0 0.0
        %601 = vmatprep.subr.mxu0 0.0
        %602 = vmatpush1.msra.mxu0 0.0
        %603 = vmatprep.subr.mxu0 0.0
        %604 = vmatpush1.msra.mxu0 0.0
        %605 = vmatprep.subr.mxu0 0.0
        %606 = vmatpush1.msra.mxu0 0.0
        %607 = vmatprep.subr.mxu0 0.0
        %608 = vmatpush1.msra.mxu0 0.0
        %609 = vmatprep.subr.mxu0 0.0
        %610 = vmatpush1.msra.mxu0 0.0
        %611 = vmatprep.subr.mxu0 0.0
        %612 = vmatpush1.msra.mxu0 0.0
        %613 = vmatprep.subr.mxu0 0.0
        %614 = vmatpush1.msra.mxu0 0.0
        %615 = vmatprep.subr.mxu0 0.0
        %616 = vmatpush1.msra.mxu0 0.0
        %617 = vmatprep.subr.mxu0 0.0
        %618 = vmatpush1.msra.mxu0 0.0
        %619 = vmatprep.subr.mxu0 0.0
        %620 = vmatpush1.msra.mxu0 0.0
        %621 = vmatprep.subr.mxu0 0.0
        %622 = vmatpush1.msra.mxu0 0.0
        %623 = vmatprep.subr.mxu0 0.0
        %624 = vmatpush1.msra.mxu0 0.0
        %625 = vmatprep.subr.mxu0 0.0
        %626 = vmatpush1.msra.mxu0 0.0
        %627 = vmatprep.subr.mxu0 0.0
        %628 = vmatpush1.msra.mxu0 0.0
        %629 = vmatprep.subr.mxu0 0.0
        %630 = vmatpush1.msra.mxu0 0.0
        %631 = vmatprep.subr.mxu0 0.0
        %632 = vmatpush1.msra.mxu0 0.0
        %633 = vmatprep.subr.mxu0 0.0
        %634 = vmatpush1.msra.mxu0 0.0
        %635 = vmatprep.subr.mxu0 0.0
        %636 = vmatpush1.msra.mxu0 0.0
        %637 = vmatprep.subr.mxu0 0.0
        %638 = vmatpush1.msra.mxu0 0.0
        %639 = vmatprep.subr.mxu0 0.0
        %640 = vmatpush1.msra.mxu0 0.0
        %641 = vmatprep.mubr.f32.mxu0 0.0
        %642 = vmatmul.mubr.f32.gmra.mrb[0].mxu0 %v575
        %v643 = vpop.f32.mrb[0].mxu0
        %v644 = vadd.f32 1e-05, %v643
        %v645 = vpop.f32.mrb[0].mxu0
        %v646 = vadd.f32 1e-05, %v645
        %647 = vdwg.mxu0
        %v648 = vrsqrt.pop %v644
        %v649 = vrsqrt.pop %v646
        %v650 = vmul.f32 %v648, %v313
        %v651 = vmul.f32 %v649, %v314
        %v652 = vlaneseq
        %v653 = vshrl.u32 %v652, 7
        %v654 = vsub.s32 0, %v653
        %v655 = vrot.slane %v650, %v654
        %v656 = vlaneseq
        %v657 = vshrl.u32 %v656, 7
        %v658 = vsub.s32 0, %v657
        %v659 = vrot.slane %v651, %v658
        %v660 = vmul.f32 %v482, %v655
        %v661 = vmul.f32 %v483, %v659
        %v662 = vmul.f32 %v484, %v655
        %v663 = vmul.f32 %v485, %v659
        %v664 = vlaneseq
        %v665 = vshrl.u32 %v664, 7
        %v666 = vsub.s32 1, %v665
        %v667 = vrot.slane %v313, %v666
        %v668 = vlaneseq
        %v669 = vshrl.u32 %v668, 7
        %v670 = vsub.s32 1, %v669
        %v671 = vrot.slane %v314, %v670
        %v672 = vadd.f32 %v660, %v667
        %v673 = vadd.f32 %v661, %v671
        %v674 = vadd.f32 %v662, %v667
        %v675 = vadd.f32 %v663, %v671
        %v676 = vmax.f32 %v672, 0.0
        %v677 = vmax.f32 %v673, 0.0
        %v678 = vmax.f32 %v674, 0.0
        %v679 = vmax.f32 %v675, 0.0
        %vm684 = vcmask 1040384
        %v685 = vrot.slane %v676, 7
        %v686 = vrot.slane %v677, 7
        %v687 = vrot.slane %v678, 7
        %v688 = vsel %vm684, %v685, %v687
        %v689 = vrot.slane %v679, 7
        %v690 = vsel %vm684, %v686, %v689
        %v695 = vsel %vm684, 0.0, %v685
        %v696 = vsel %vm684, 0.0, %v686
        %vm697 = vcmask 1046528
        %v698 = vrot.slane %v676, 1
        %v699 = vrot.slane %v678, 1
        %v700 = vsel %vm697, %v698, %v699
        %v701 = vrot.slane %v677, 1
        %v702 = vrot.slane %v679, 1
        %v703 = vsel %vm697, %v701, %v702
        %v708 = vsel %vm697, %v699, 0.0
        %v709 = vsel %vm697, %v702, 0.0
        %v710 = vld [vmem:[%s4] sm:$0xff]
        %v711 = vld [vmem:[%s4 + $0x8] sm:$0xff]
        %v712 = vld [vmem:[%s4 + $0x10] sm:$0xff]
        %v713 = vld [vmem:[%s4 + $0x18] sm:$0xff]
        %v714 = vld [vmem:[%s4 + $0x20] sm:$0xff]
        %v715 = vld [vmem:[%s4 + $0x28] sm:$0xff]
        %v716 = vld [vmem:[%s4 + $0x30] sm:$0xff]
        %v717 = vld [vmem:[%s4 + $0x38] sm:$0xff]
        %v718 = vld [vmem:[%s4 + $0x40] sm:$0xff]
        %v719 = vld [vmem:[%s4 + $0x48] sm:$0xff]
        %v720 = vld [vmem:[%s4 + $0x50] sm:$0xff]
        %v721 = vld [vmem:[%s4 + $0x58] sm:$0xff]
        %v722 = vld [vmem:[%s4 + $0x60] sm:$0xff]
        %v723 = vld [vmem:[%s4 + $0x68] sm:$0xff]
        %v724 = vld [vmem:[%s4 + $0x70] sm:$0xff]
        %v725 = vld [vmem:[%s4 + $0x78] sm:$0xff]
        %v726 = vld [vmem:[%s4 + $0x80] sm:$0xff]
        %v727 = vld [vmem:[%s4 + $0x88] sm:$0xff]
        %v728 = vld [vmem:[%s4 + $0x90] sm:$0xff]
        %v729 = vld [vmem:[%s4 + $0x98] sm:$0xff]
        %v730 = vld [vmem:[%s4 + $0xa0] sm:$0xff]
        %v731 = vld [vmem:[%s4 + $0xa8] sm:$0xff]
        %v732 = vld [vmem:[%s4 + $0xb0] sm:$0xff]
        %v733 = vld [vmem:[%s4 + $0xb8] sm:$0xff]
        %v734 = vld [vmem:[%s4 + $0xc0] sm:$0xff]
        %v735 = vld [vmem:[%s4 + $0xc8] sm:$0xff]
        %v736 = vld [vmem:[%s4 + $0xd0] sm:$0xff]
        %v737 = vld [vmem:[%s4 + $0xd8] sm:$0xff]
        %v738 = vld [vmem:[%s4 + $0xe0] sm:$0xff]
        %v739 = vld [vmem:[%s4 + $0xe8] sm:$0xff]
        %v740 = vld [vmem:[%s4 + $0xf0] sm:$0xff]
        %v741 = vld [vmem:[%s4 + $0xf8] sm:$0xff]
        %v742 = vld [vmem:[%s4 + $0x100] sm:$0xff]
        %v743 = vld [vmem:[%s4 + $0x108] sm:$0xff]
        %v744 = vld [vmem:[%s4 + $0x110] sm:$0xff]
        %v745 = vld [vmem:[%s4 + $0x118] sm:$0xff]
        %v746 = vld [vmem:[%s4 + $0x120] sm:$0xff]
        %v747 = vld [vmem:[%s4 + $0x128] sm:$0xff]
        %v748 = vld [vmem:[%s4 + $0x130] sm:$0xff]
        %v749 = vld [vmem:[%s4 + $0x138] sm:$0xff]
        %v750 = vld [vmem:[%s4 + $0x140] sm:$0xff]
        %v751 = vld [vmem:[%s4 + $0x148] sm:$0xff]
        %v752 = vld [vmem:[%s4 + $0x150] sm:$0xff]
        %v753 = vld [vmem:[%s4 + $0x158] sm:$0xff]
        %v754 = vld [vmem:[%s4 + $0x160] sm:$0xff]
        %v755 = vld [vmem:[%s4 + $0x168] sm:$0xff]
        %v756 = vld [vmem:[%s4 + $0x170] sm:$0xff]
        %v757 = vld [vmem:[%s4 + $0x178] sm:$0xff]
        %v758 = vld [vmem:[%s4 + $0x180] sm:$0xff]
        %v759 = vld [vmem:[%s4 + $0x188] sm:$0xff]
        %v760 = vld [vmem:[%s4 + $0x190] sm:$0xff]
        %v761 = vld [vmem:[%s4 + $0x198] sm:$0xff]
        %v762 = vld [vmem:[%s4 + $0x1a0] sm:$0xff]
        %v763 = vld [vmem:[%s4 + $0x1a8] sm:$0xff]
        %v764 = vld [vmem:[%s4 + $0x1b0] sm:$0xff]
        %v765 = vld [vmem:[%s4 + $0x1b8] sm:$0xff]
        %v766 = vld [vmem:[%s4 + $0x1c0] sm:$0xff]
        %v767 = vld [vmem:[%s4 + $0x1c8] sm:$0xff]
        %v768 = vld [vmem:[%s4 + $0x1d0] sm:$0xff]
        %v769 = vld [vmem:[%s4 + $0x1d8] sm:$0xff]
        %v770 = vld [vmem:[%s4 + $0x1e0] sm:$0xff]
        %v771 = vld [vmem:[%s4 + $0x1e8] sm:$0xff]
        %v772 = vld [vmem:[%s4 + $0x1f0] sm:$0xff]
        %v773 = vld [vmem:[%s4 + $0x1f8] sm:$0xff]
        %v774 = vld [vmem:[%s4 + $0x200] sm:$0xff]
        %v775 = vld [vmem:[%s4 + $0x208] sm:$0xff]
        %v776 = vld [vmem:[%s4 + $0x210] sm:$0xff]
        %v777 = vld [vmem:[%s4 + $0x218] sm:$0xff]
        %v778 = vld [vmem:[%s4 + $0x220] sm:$0xff]
        %v779 = vld [vmem:[%s4 + $0x228] sm:$0xff]
        %v780 = vld [vmem:[%s4 + $0x230] sm:$0xff]
        %v781 = vld [vmem:[%s4 + $0x238] sm:$0xff]
        %v782 = vld [vmem:[%s4 + $0x240] sm:$0xff]
        %v783 = vld [vmem:[%s4 + $0x248] sm:$0xff]
        %v784 = vld [vmem:[%s4 + $0x250] sm:$0xff]
        %v785 = vld [vmem:[%s4 + $0x258] sm:$0xff]
        %v786 = vld [vmem:[%s4 + $0x260] sm:$0xff]
        %v787 = vld [vmem:[%s4 + $0x268] sm:$0xff]
        %v788 = vld [vmem:[%s4 + $0x270] sm:$0xff]
        %v789 = vld [vmem:[%s4 + $0x278] sm:$0xff]
        %v790 = vld [vmem:[%s4 + $0x280] sm:$0xff]
        %v791 = vld [vmem:[%s4 + $0x288] sm:$0xff]
        %v792 = vld [vmem:[%s4 + $0x290] sm:$0xff]
        %v793 = vld [vmem:[%s4 + $0x298] sm:$0xff]
        %v794 = vld [vmem:[%s4 + $0x2a0] sm:$0xff]
        %v795 = vld [vmem:[%s4 + $0x2a8] sm:$0xff]
        %v796 = vld [vmem:[%s4 + $0x2b0] sm:$0xff]
        %v797 = vld [vmem:[%s4 + $0x2b8] sm:$0xff]
        %v798 = vld [vmem:[%s4 + $0x2c0] sm:$0xff]
        %v799 = vld [vmem:[%s4 + $0x2c8] sm:$0xff]
        %v800 = vld [vmem:[%s4 + $0x2d0] sm:$0xff]
        %v801 = vld [vmem:[%s4 + $0x2d8] sm:$0xff]
        %v802 = vld [vmem:[%s4 + $0x2e0] sm:$0xff]
        %v803 = vld [vmem:[%s4 + $0x2e8] sm:$0xff]
        %v804 = vld [vmem:[%s4 + $0x2f0] sm:$0xff]
        %v805 = vld [vmem:[%s4 + $0x2f8] sm:$0xff]
        %v806 = vld [vmem:[%s4 + $0x300] sm:$0xff]
        %v807 = vld [vmem:[%s4 + $0x308] sm:$0xff]
        %v808 = vld [vmem:[%s4 + $0x310] sm:$0xff]
        %v809 = vld [vmem:[%s4 + $0x318] sm:$0xff]
        %v810 = vld [vmem:[%s4 + $0x320] sm:$0xff]
        %v811 = vld [vmem:[%s4 + $0x328] sm:$0xff]
        %v812 = vld [vmem:[%s4 + $0x330] sm:$0xff]
        %v813 = vld [vmem:[%s4 + $0x338] sm:$0xff]
        %v814 = vld [vmem:[%s4 + $0x340] sm:$0xff]
        %v815 = vld [vmem:[%s4 + $0x348] sm:$0xff]
        %v816 = vld [vmem:[%s4 + $0x350] sm:$0xff]
        %v817 = vld [vmem:[%s4 + $0x358] sm:$0xff]
        %v818 = vld [vmem:[%s4 + $0x360] sm:$0xff]
        %v819 = vld [vmem:[%s4 + $0x368] sm:$0xff]
        %v820 = vld [vmem:[%s4 + $0x370] sm:$0xff]
        %v821 = vld [vmem:[%s4 + $0x378] sm:$0xff]
        %v822 = vld [vmem:[%s4 + $0x380] sm:$0xff]
        %v823 = vld [vmem:[%s4 + $0x388] sm:$0xff]
        %v824 = vld [vmem:[%s4 + $0x390] sm:$0xff]
        %v825 = vld [vmem:[%s4 + $0x398] sm:$0xff]
        %v826 = vld [vmem:[%s4 + $0x3a0] sm:$0xff]
        %v827 = vld [vmem:[%s4 + $0x3a8] sm:$0xff]
        %v828 = vld [vmem:[%s4 + $0x3b0] sm:$0xff]
        %v829 = vld [vmem:[%s4 + $0x3b8] sm:$0xff]
        %v830 = vld [vmem:[%s4 + $0x3c0] sm:$0xff]
        %v831 = vld [vmem:[%s4 + $0x3c8] sm:$0xff]
        %v832 = vld [vmem:[%s4 + $0x3d0] sm:$0xff]
        %v833 = vld [vmem:[%s4 + $0x3d8] sm:$0xff]
        %v834 = vld [vmem:[%s4 + $0x3e0] sm:$0xff]
        %v835 = vld [vmem:[%s4 + $0x3e8] sm:$0xff]
        %v836 = vld [vmem:[%s4 + $0x3f0] sm:$0xff]
        %v837 = vld [vmem:[%s4 + $0x3f8] sm:$0xff]
        %v838 = vld [vmem:[%s4 + $0x400] sm:$0xff]
        %v839 = vld [vmem:[%s4 + $0x408] sm:$0xff]
        %v840 = vld [vmem:[%s4 + $0x410] sm:$0xff]
        %v841 = vld [vmem:[%s4 + $0x418] sm:$0xff]
        %v842 = vld [vmem:[%s4 + $0x420] sm:$0xff]
        %v843 = vld [vmem:[%s4 + $0x428] sm:$0xff]
        %v844 = vld [vmem:[%s4 + $0x430] sm:$0xff]
        %v845 = vld [vmem:[%s4 + $0x438] sm:$0xff]
        %v846 = vld [vmem:[%s4 + $0x440] sm:$0xff]
        %v847 = vld [vmem:[%s4 + $0x448] sm:$0xff]
        %v848 = vld [vmem:[%s4 + $0x450] sm:$0xff]
        %v849 = vld [vmem:[%s4 + $0x458] sm:$0xff]
        %v850 = vld [vmem:[%s4 + $0x460] sm:$0xff]
        %v851 = vld [vmem:[%s4 + $0x468] sm:$0xff]
        %v852 = vld [vmem:[%s4 + $0x470] sm:$0xff]
        %v853 = vld [vmem:[%s4 + $0x478] sm:$0xff]
        %v854 = vld [vmem:[%s4 + $0x480] sm:$0xff]
        %v855 = vld [vmem:[%s4 + $0x488] sm:$0xff]
        %v856 = vld [vmem:[%s4 + $0x490] sm:$0xff]
        %v857 = vld [vmem:[%s4 + $0x498] sm:$0xff]
        %v858 = vld [vmem:[%s4 + $0x4a0] sm:$0xff]
        %v859 = vld [vmem:[%s4 + $0x4a8] sm:$0xff]
        %v860 = vld [vmem:[%s4 + $0x4b0] sm:$0xff]
        %v861 = vld [vmem:[%s4 + $0x4b8] sm:$0xff]
        %v862 = vld [vmem:[%s4 + $0x4c0] sm:$0xff]
        %v863 = vld [vmem:[%s4 + $0x4c8] sm:$0xff]
        %v864 = vld [vmem:[%s4 + $0x4d0] sm:$0xff]
        %v865 = vld [vmem:[%s4 + $0x4d8] sm:$0xff]
        %v866 = vld [vmem:[%s4 + $0x4e0] sm:$0xff]
        %v867 = vld [vmem:[%s4 + $0x4e8] sm:$0xff]
        %v868 = vld [vmem:[%s4 + $0x4f0] sm:$0xff]
        %v869 = vld [vmem:[%s4 + $0x4f8] sm:$0xff]
        %v870 = vld [vmem:[%s4 + $0x500] sm:$0xff]
        %v871 = vld [vmem:[%s4 + $0x508] sm:$0xff]
        %v872 = vld [vmem:[%s4 + $0x510] sm:$0xff]
        %v873 = vld [vmem:[%s4 + $0x518] sm:$0xff]
        %v874 = vld [vmem:[%s4 + $0x520] sm:$0xff]
        %v875 = vld [vmem:[%s4 + $0x528] sm:$0xff]
        %v876 = vld [vmem:[%s4 + $0x530] sm:$0xff]
        %v877 = vld [vmem:[%s4 + $0x538] sm:$0xff]
        %v878 = vld [vmem:[%s4 + $0x540] sm:$0xff]
        %v879 = vld [vmem:[%s4 + $0x548] sm:$0xff]
        %v880 = vld [vmem:[%s4 + $0x550] sm:$0xff]
        %v881 = vld [vmem:[%s4 + $0x558] sm:$0xff]
        %v882 = vld [vmem:[%s4 + $0x560] sm:$0xff]
        %v883 = vld [vmem:[%s4 + $0x568] sm:$0xff]
        %v884 = vld [vmem:[%s4 + $0x570] sm:$0xff]
        %v885 = vld [vmem:[%s4 + $0x578] sm:$0xff]
        %v886 = vld [vmem:[%s4 + $0x580] sm:$0xff]
        %v887 = vld [vmem:[%s4 + $0x588] sm:$0xff]
        %v888 = vld [vmem:[%s4 + $0x590] sm:$0xff]
        %v889 = vld [vmem:[%s4 + $0x598] sm:$0xff]
        %v890 = vld [vmem:[%s4 + $0x5a0] sm:$0xff]
        %v891 = vld [vmem:[%s4 + $0x5a8] sm:$0xff]
        %v892 = vld [vmem:[%s4 + $0x5b0] sm:$0xff]
        %v893 = vld [vmem:[%s4 + $0x5b8] sm:$0xff]
        %v894 = vld [vmem:[%s4 + $0x5c0] sm:$0xff]
        %v895 = vld [vmem:[%s4 + $0x5c8] sm:$0xff]
        %v896 = vld [vmem:[%s4 + $0x5d0] sm:$0xff]
        %v897 = vld [vmem:[%s4 + $0x5d8] sm:$0xff]
        %v898 = vld [vmem:[%s4 + $0x5e0] sm:$0xff]
        %v899 = vld [vmem:[%s4 + $0x5e8] sm:$0xff]
        %v900 = vld [vmem:[%s4 + $0x5f0] sm:$0xff]
        %v901 = vld [vmem:[%s4 + $0x5f8] sm:$0xff]
        %v902 = vlaneseq
        %v903 = vshrl.u32 %v902, 7
        %v904 = vsub.s32 2, %v903
        %v905 = vrot.slane %v313, %v904
        %v906 = vlaneseq
        %v907 = vshrl.u32 %v906, 7
        %v908 = vsub.s32 2, %v907
        %v909 = vrot.slane %v314, %v908
        %910 = vmatprep.subr.mxu0 %v711
        %911 = vmatpush1.msra.mxu0 %v710
        %912 = vmatprep.subr.mxu0 %v713
        %913 = vmatpush1.msra.mxu0 %v712
        %914 = vmatprep.subr.mxu0 %v715
        %915 = vmatpush1.msra.mxu0 %v714
        %916 = vmatprep.subr.mxu0 %v717
        %917 = vmatpush1.msra.mxu0 %v716
        %918 = vmatprep.subr.mxu0 %v719
        %919 = vmatpush1.msra.mxu0 %v718
        %920 = vmatprep.subr.mxu0 %v721
        %921 = vmatpush1.msra.mxu0 %v720
        %922 = vmatprep.subr.mxu0 %v723
        %923 = vmatpush1.msra.mxu0 %v722
        %924 = vmatprep.subr.mxu0 %v725
        %925 = vmatpush1.msra.mxu0 %v724
        %926 = vmatprep.subr.mxu0 %v727
        %927 = vmatpush1.msra.mxu0 %v726
        %928 = vmatprep.subr.mxu0 %v729
        %929 = vmatpush1.msra.mxu0 %v728
        %930 = vmatprep.subr.mxu0 %v731
        %931 = vmatpush1.msra.mxu0 %v730
        %932 = vmatprep.subr.mxu0 %v733
        %933 = vmatpush1.msra.mxu0 %v732
        %934 = vmatprep.subr.mxu0 %v735
        %935 = vmatpush1.msra.mxu0 %v734
        %936 = vmatprep.subr.mxu0 %v737
        %937 = vmatpush1.msra.mxu0 %v736
        %938 = vmatprep.subr.mxu0 %v739
        %939 = vmatpush1.msra.mxu0 %v738
        %940 = vmatprep.subr.mxu0 %v741
        %941 = vmatpush1.msra.mxu0 %v740
        %942 = vmatprep.subr.mxu0 %v743
        %943 = vmatpush1.msra.mxu0 %v742
        %944 = vmatprep.subr.mxu0 %v745
        %945 = vmatpush1.msra.mxu0 %v744
        %946 = vmatprep.subr.mxu0 %v747
        %947 = vmatpush1.msra.mxu0 %v746
        %948 = vmatprep.subr.mxu0 %v749
        %949 = vmatpush1.msra.mxu0 %v748
        %950 = vmatprep.subr.mxu0 %v751
        %951 = vmatpush1.msra.mxu0 %v750
        %952 = vmatprep.subr.mxu0 %v753
        %953 = vmatpush1.msra.mxu0 %v752
        %954 = vmatprep.subr.mxu0 %v755
        %955 = vmatpush1.msra.mxu0 %v754
        %956 = vmatprep.subr.mxu0 %v757
        %957 = vmatpush1.msra.mxu0 %v756
        %958 = vmatprep.subr.mxu0 %v759
        %959 = vmatpush1.msra.mxu0 %v758
        %960 = vmatprep.subr.mxu0 %v761
        %961 = vmatpush1.msra.mxu0 %v760
        %962 = vmatprep.subr.mxu0 %v763
        %963 = vmatpush1.msra.mxu0 %v762
        %964 = vmatprep.subr.mxu0 %v765
        %965 = vmatpush1.msra.mxu0 %v764
        %966 = vmatprep.subr.mxu0 %v767
        %967 = vmatpush1.msra.mxu0 %v766
        %968 = vmatprep.subr.mxu0 %v769
        %969 = vmatpush1.msra.mxu0 %v768
        %970 = vmatprep.subr.mxu0 %v771
        %971 = vmatpush1.msra.mxu0 %v770
        %972 = vmatprep.subr.mxu0 %v773
        %973 = vmatpush1.msra.mxu0 %v772
        %974 = vmatprep.mubr.f32.mxu0 %v696
        %975 = vmatmul.mubr.f32.gmra.mrb[0].mxu0 %v695
        %v976 = vpop.f32.mrb[0].mxu0
        %v977 = vadd.f32 %v905, %v976
        %v978 = vpop.f32.mrb[0].mxu0
        %v979 = vadd.f32 %v909, %v978
        %980 = vmatprep.mubr.f32.mxu0 %v690
        %981 = vmatmul.mubr.f32.gmra.mrb[0].mxu0 %v688
        %v982 = vpop.f32.mrb[0].mxu0
        %v983 = vadd.f32 %v905, %v982
        %v984 = vpop.f32.mrb[0].mxu0
        %v985 = vadd.f32 %v909, %v984
        %986 = vdwg.mxu0
        %987 = vmatprep.subr.mxu0 %v775
        %988 = vmatpush1.msra.mxu0 %v774
        %989 = vmatprep.subr.mxu0 %v777
        %990 = vmatpush1.msra.mxu0 %v776
        %991 = vmatprep.subr.mxu0 %v779
        %992 = vmatpush1.msra.mxu0 %v778
        %993 = vmatprep.subr.mxu0 %v781
        %994 = vmatpush1.msra.mxu0 %v780
        %995 = vmatprep.subr.mxu0 %v783
        %996 = vmatpush1.msra.mxu0 %v782
        %997 = vmatprep.subr.mxu0 %v785
        %998 = vmatpush1.msra.mxu0 %v784
        %999 = vmatprep.subr.mxu0 %v787
        %1000 = vmatpush1.msra.mxu0 %v786
        %1001 = vmatprep.subr.mxu0 %v789
        %1002 = vmatpush1.msra.mxu0 %v788
        %1003 = vmatprep.subr.mxu0 %v791
        %1004 = vmatpush1.msra.mxu0 %v790
        %1005 = vmatprep.subr.mxu0 %v793
        %1006 = vmatpush1.msra.mxu0 %v792
        %1007 = vmatprep.subr.mxu0 %v795
        %1008 = vmatpush1.msra.mxu0 %v794
        %1009 = vmatprep.subr.mxu0 %v797
        %1010 = vmatpush1.msra.mxu0 %v796
        %1011 = vmatprep.subr.mxu0 %v799
        %1012 = vmatpush1.msra.mxu0 %v798
        %1013 = vmatprep.subr.mxu0 %v801
        %1014 = vmatpush1.msra.mxu0 %v800
        %1015 = vmatprep.subr.mxu0 %v803
        %1016 = vmatpush1.msra.mxu0 %v802
        %1017 = vmatprep.subr.mxu0 %v805
        %1018 = vmatpush1.msra.mxu0 %v804
        %1019 = vmatprep.subr.mxu0 %v807
        %1020 = vmatpush1.msra.mxu0 %v806
        %1021 = vmatprep.subr.mxu0 %v809
        %1022 = vmatpush1.msra.mxu0 %v808
        %1023 = vmatprep.subr.mxu0 %v811
        %1024 = vmatpush1.msra.mxu0 %v810
        %1025 = vmatprep.subr.mxu0 %v813
        %1026 = vmatpush1.msra.mxu0 %v812
        %1027 = vmatprep.subr.mxu0 %v815
        %1028 = vmatpush1.msra.mxu0 %v814
        %1029 = vmatprep.subr.mxu0 %v817
        %1030 = vmatpush1.msra.mxu0 %v816
        %1031 = vmatprep.subr.mxu0 %v819
        %1032 = vmatpush1.msra.mxu0 %v818
        %1033 = vmatprep.subr.mxu0 %v821
        %1034 = vmatpush1.msra.mxu0 %v820
        %1035 = vmatprep.subr.mxu0 %v823
        %1036 = vmatpush1.msra.mxu0 %v822
        %1037 = vmatprep.subr.mxu0 %v825
        %1038 = vmatpush1.msra.mxu0 %v824
        %1039 = vmatprep.subr.mxu0 %v827
        %1040 = vmatpush1.msra.mxu0 %v826
        %1041 = vmatprep.subr.mxu0 %v829
        %1042 = vmatpush1.msra.mxu0 %v828
        %1043 = vmatprep.subr.mxu0 %v831
        %1044 = vmatpush1.msra.mxu0 %v830
        %1045 = vmatprep.subr.mxu0 %v833
        %1046 = vmatpush1.msra.mxu0 %v832
        %1047 = vmatprep.subr.mxu0 %v835
        %1048 = vmatpush1.msra.mxu0 %v834
        %1049 = vmatprep.subr.mxu0 %v837
        %1050 = vmatpush1.msra.mxu0 %v836
        %1051 = vmatprep.mubr.f32.mxu0 %v677
        %1052 = vmatmul.mubr.f32.gmra.mrb[0].mxu0 %v676
        %v1053 = vpop.f32.mrb[0].mxu0
        %v1054 = vadd.f32 %v977, %v1053
        %v1055 = vpop.f32.mrb[0].mxu0
        %v1056 = vadd.f32 %v979, %v1055
        %1057 = vmatprep.mubr.f32.mxu0 %v679
        %1058 = vmatmul.mubr.f32.gmra.mrb[0].mxu0 %v678
        %v1059 = vpop.f32.mrb[0].mxu0
        %v1060 = vadd.f32 %v983, %v1059
        %v1061 = vpop.f32.mrb[0].mxu0
        %v1062 = vadd.f32 %v985, %v1061
        %1063 = vdwg.mxu0
        %1064 = vmatprep.subr.mxu0 %v839
        %1065 = vmatpush1.msra.mxu0 %v838
        %1066 = vmatprep.subr.mxu0 %v841
        %1067 = vmatpush1.msra.mxu0 %v840
        %1068 = vmatprep.subr.mxu0 %v843
        %1069 = vmatpush1.msra.mxu0 %v842
        %1070 = vmatprep.subr.mxu0 %v845
        %1071 = vmatpush1.msra.mxu0 %v844
        %1072 = vmatprep.subr.mxu0 %v847
        %1073 = vmatpush1.msra.mxu0 %v846
        %1074 = vmatprep.subr.mxu0 %v849
        %1075 = vmatpush1.msra.mxu0 %v848
        %1076 = vmatprep.subr.mxu0 %v851
        %1077 = vmatpush1.msra.mxu0 %v850
        %1078 = vmatprep.subr.mxu0 %v853
        %1079 = vmatpush1.msra.mxu0 %v852
        %1080 = vmatprep.subr.mxu0 %v855
        %1081 = vmatpush1.msra.mxu0 %v854
        %1082 = vmatprep.subr.mxu0 %v857
        %1083 = vmatpush1.msra.mxu0 %v856
        %1084 = vmatprep.subr.mxu0 %v859
        %1085 = vmatpush1.msra.mxu0 %v858
        %1086 = vmatprep.subr.mxu0 %v861
        %1087 = vmatpush1.msra.mxu0 %v860
        %1088 = vmatprep.subr.mxu0 %v863
        %1089 = vmatpush1.msra.mxu0 %v862
        %1090 = vmatprep.subr.mxu0 %v865
        %1091 = vmatpush1.msra.mxu0 %v864
        %1092 = vmatprep.subr.mxu0 %v867
        %1093 = vmatpush1.msra.mxu0 %v866
        %1094 = vmatprep.subr.mxu0 %v869
        %1095 = vmatpush1.msra.mxu0 %v868
        %1096 = vmatprep.subr.mxu0 %v871
        %1097 = vmatpush1.msra.mxu0 %v870
        %1098 = vmatprep.subr.mxu0 %v873
        %1099 = vmatpush1.msra.mxu0 %v872
        %1100 = vmatprep.subr.mxu0 %v875
        %1101 = vmatpush1.msra.mxu0 %v874
        %1102 = vmatprep.subr.mxu0 %v877
        %1103 = vmatpush1.msra.mxu0 %v876
        %1104 = vmatprep.subr.mxu0 %v879
        %1105 = vmatpush1.msra.mxu0 %v878
        %1106 = vmatprep.subr.mxu0 %v881
        %1107 = vmatpush1.msra.mxu0 %v880
        %1108 = vmatprep.subr.mxu0 %v883
        %1109 = vmatpush1.msra.mxu0 %v882
        %1110 = vmatprep.subr.mxu0 %v885
        %1111 = vmatpush1.msra.mxu0 %v884
        %1112 = vmatprep.subr.mxu0 %v887
        %1113 = vmatpush1.msra.mxu0 %v886
        %1114 = vmatprep.subr.mxu0 %v889
        %1115 = vmatpush1.msra.mxu0 %v888
        %1116 = vmatprep.subr.mxu0 %v891
        %1117 = vmatpush1.msra.mxu0 %v890
        %1118 = vmatprep.subr.mxu0 %v893
        %1119 = vmatpush1.msra.mxu0 %v892
        %1120 = vmatprep.subr.mxu0 %v895
        %1121 = vmatpush1.msra.mxu0 %v894
        %1122 = vmatprep.subr.mxu0 %v897
        %1123 = vmatpush1.msra.mxu0 %v896
        %1124 = vmatprep.subr.mxu0 %v899
        %1125 = vmatpush1.msra.mxu0 %v898
        %1126 = vmatprep.subr.mxu0 %v901
        %1127 = vmatpush1.msra.mxu0 %v900
        %1128 = vmatprep.mubr.f32.mxu0 %v703
        %1129 = vmatmul.mubr.f32.gmra.mrb[0].mxu0 %v700
        %v1130 = vpop.f32.mrb[0].mxu0
        %v1131 = vadd.f32 %v1054, %v1130
        %v1132 = vpop.f32.mrb[0].mxu0
        %v1133 = vadd.f32 %v1056, %v1132
        %1134 = vmatprep.mubr.f32.mxu0 %v709
        %1135 = vmatmul.mubr.f32.gmra.mrb[0].mxu0 %v708
        %v1136 = vpop.f32.mrb[0].mxu0
        %v1137 = vadd.f32 %v1060, %v1136
        %v1138 = vpop.f32.mrb[0].mxu0
        %v1139 = vadd.f32 %v1062, %v1138
        %1140 = vdwg.mxu0
        %v1141 = vadd.f32 %v1131, %v1137
        %v1142 = vrot.slane %v1141, 4
        %v1143 = vadd.f32 %v1141, %v1142
        %v1144 = vrot.slane %v1143, 2
        %v1145 = vadd.f32 %v1143, %v1144
        %v1146 = vrot.slane %v1145, 1
        %v1147 = vadd.f32 %v1145, %v1146
        %v1148 = vadd.f32 %v1133, %v1139
        %v1149 = vrot.slane %v1148, 4
        %v1150 = vadd.f32 %v1148, %v1149
        %v1151 = vrot.slane %v1150, 2
        %v1152 = vadd.f32 %v1150, %v1151
        %v1153 = vrot.slane %v1152, 1
        %v1154 = vadd.f32 %v1152, %v1153
        %1155 = vmatprep.subr.mxu0 0.0
        %1156 = vmatpush1.msra.mxu0 %v279
        %1157 = vmatprep.subr.mxu0 0.0
        %1158 = vmatpush1.msra.mxu0 %v280
        %1159 = vmatprep.subr.mxu0 0.0
        %1160 = vmatpush1.msra.mxu0 %v281
        %1161 = vmatprep.subr.mxu0 0.0
        %1162 = vmatpush1.msra.mxu0 %v282
        %1163 = vmatprep.subr.mxu0 0.0
        %1164 = vmatpush1.msra.mxu0 %v283
        %1165 = vmatprep.subr.mxu0 0.0
        %1166 = vmatpush1.msra.mxu0 %v284
        %1167 = vmatprep.subr.mxu0 0.0
        %1168 = vmatpush1.msra.mxu0 %v285
        %1169 = vmatprep.subr.mxu0 0.0
        %1170 = vmatpush1.msra.mxu0 %v286
        %1171 = vmatprep.subr.mxu0 0.0
        %1172 = vmatpush1.msra.mxu0 %v287
        %1173 = vmatprep.subr.mxu0 0.0
        %1174 = vmatpush1.msra.mxu0 %v288
        %1175 = vmatprep.subr.mxu0 0.0
        %1176 = vmatpush1.msra.mxu0 %v289
        %1177 = vmatprep.subr.mxu0 0.0
        %1178 = vmatpush1.msra.mxu0 %v290
        %1179 = vmatprep.subr.mxu0 0.0
        %1180 = vmatpush1.msra.mxu0 %v291
        %1181 = vmatprep.subr.mxu0 0.0
        %1182 = vmatpush1.msra.mxu0 %v292
        %1183 = vmatprep.subr.mxu0 0.0
        %1184 = vmatpush1.msra.mxu0 %v293
        %1185 = vmatprep.subr.mxu0 0.0
        %1186 = vmatpush1.msra.mxu0 %v294
        %1187 = vmatprep.subr.mxu0 0.0
        %1188 = vmatpush1.msra.mxu0 %v295
        %1189 = vmatprep.subr.mxu0 0.0
        %1190 = vmatpush1.msra.mxu0 %v296
        %1191 = vmatprep.subr.mxu0 0.0
        %1192 = vmatpush1.msra.mxu0 %v297
        %1193 = vmatprep.subr.mxu0 0.0
        %1194 = vmatpush1.msra.mxu0 %v298
        %1195 = vmatprep.subr.mxu0 0.0
        %1196 = vmatpush1.msra.mxu0 %v299
        %1197 = vmatprep.subr.mxu0 0.0
        %1198 = vmatpush1.msra.mxu0 %v300
        %1199 = vmatprep.subr.mxu0 0.0
        %1200 = vmatpush1.msra.mxu0 %v301
        %1201 = vmatprep.subr.mxu0 0.0
        %1202 = vmatpush1.msra.mxu0 %v302
        %1203 = vmatprep.subr.mxu0 0.0
        %1204 = vmatpush1.msra.mxu0 %v303
        %1205 = vmatprep.subr.mxu0 0.0
        %1206 = vmatpush1.msra.mxu0 %v304
        %1207 = vmatprep.subr.mxu0 0.0
        %1208 = vmatpush1.msra.mxu0 %v305
        %1209 = vmatprep.subr.mxu0 0.0
        %1210 = vmatpush1.msra.mxu0 %v306
        %1211 = vmatprep.subr.mxu0 0.0
        %1212 = vmatpush1.msra.mxu0 %v307
        %1213 = vmatprep.subr.mxu0 0.0
        %1214 = vmatpush1.msra.mxu0 %v308
        %1215 = vmatprep.subr.mxu0 0.0
        %1216 = vmatpush1.msra.mxu0 %v309
        %1217 = vmatprep.subr.mxu0 0.0
        %1218 = vmatpush1.msra.mxu0 %v310
        %1219 = vmatprep.mubr.f32.mxu0 %v1154
        %1220 = vmatmul.mubr.f32.gmra.mrb[0].mxu0 %v1147
        %v1221 = vpop.f32.mrb[0].mxu0
        %v1222 = vadd.f32 0.0, %v1221
        %v1223 = vpop.f32.mrb[0].mxu0
        %1224 = vdwg.mxu0
        %v1226 = vsel %vm399, %v1222, 0
        %1228 = vmatprep.subr.mxu0 %v312
        %1229 = vmatpush1.msra.mxu0 %v311
        %1230 = vmatprep.subr.mxu0 0.0
        %1231 = vmatpush1.msra.mxu0 0.0
        %1232 = vmatprep.subr.mxu0 0.0
        %1233 = vmatpush1.msra.mxu0 0.0
        %1234 = vmatprep.subr.mxu0 0.0
        %1235 = vmatpush1.msra.mxu0 0.0
        %1236 = vmatprep.subr.mxu0 0.0
        %1237 = vmatpush1.msra.mxu0 0.0
        %1238 = vmatprep.subr.mxu0 0.0
        %1239 = vmatpush1.msra.mxu0 0.0
        %1240 = vmatprep.subr.mxu0 0.0
        %1241 = vmatpush1.msra.mxu0 0.0
        %1242 = vmatprep.subr.mxu0 0.0
        %1243 = vmatpush1.msra.mxu0 0.0
        %1244 = vmatprep.subr.mxu0 0.0
        %1245 = vmatpush1.msra.mxu0 0.0
        %1246 = vmatprep.subr.mxu0 0.0
        %1247 = vmatpush1.msra.mxu0 0.0
        %1248 = vmatprep.subr.mxu0 0.0
        %1249 = vmatpush1.msra.mxu0 0.0
        %1250 = vmatprep.subr.mxu0 0.0
        %1251 = vmatpush1.msra.mxu0 0.0
        %1252 = vmatprep.subr.mxu0 0.0
        %1253 = vmatpush1.msra.mxu0 0.0
        %1254 = vmatprep.subr.mxu0 0.0
        %1255 = vmatpush1.msra.mxu0 0.0
        %1256 = vmatprep.subr.mxu0 0.0
        %1257 = vmatpush1.msra.mxu0 0.0
        %1258 = vmatprep.subr.mxu0 0.0
        %1259 = vmatpush1.msra.mxu0 0.0
        %1260 = vmatprep.subr.mxu0 0.0
        %1261 = vmatpush1.msra.mxu0 0.0
        %1262 = vmatprep.subr.mxu0 0.0
        %1263 = vmatpush1.msra.mxu0 0.0
        %1264 = vmatprep.subr.mxu0 0.0
        %1265 = vmatpush1.msra.mxu0 0.0
        %1266 = vmatprep.subr.mxu0 0.0
        %1267 = vmatpush1.msra.mxu0 0.0
        %1268 = vmatprep.subr.mxu0 0.0
        %1269 = vmatpush1.msra.mxu0 0.0
        %1270 = vmatprep.subr.mxu0 0.0
        %1271 = vmatpush1.msra.mxu0 0.0
        %1272 = vmatprep.subr.mxu0 0.0
        %1273 = vmatpush1.msra.mxu0 0.0
        %1274 = vmatprep.subr.mxu0 0.0
        %1275 = vmatpush1.msra.mxu0 0.0
        %1276 = vmatprep.subr.mxu0 0.0
        %1277 = vmatpush1.msra.mxu0 0.0
        %1278 = vmatprep.subr.mxu0 0.0
        %1279 = vmatpush1.msra.mxu0 0.0
        %1280 = vmatprep.subr.mxu0 0.0
        %1281 = vmatpush1.msra.mxu0 0.0
        %1282 = vmatprep.subr.mxu0 0.0
        %1283 = vmatpush1.msra.mxu0 0.0
        %1284 = vmatprep.subr.mxu0 0.0
        %1285 = vmatpush1.msra.mxu0 0.0
        %1286 = vmatprep.subr.mxu0 0.0
        %1287 = vmatpush1.msra.mxu0 0.0
        %1288 = vmatprep.subr.mxu0 0.0
        %1289 = vmatpush1.msra.mxu0 0.0
        %1290 = vmatprep.subr.mxu0 0.0
        %1291 = vmatpush1.msra.mxu0 0.0
        %1292 = vmatprep.mubr.f32.mxu0 0.0
        %1293 = vmatmul.mubr.f32.gmra.mrb[0].mxu0 %v1226
        %v1294 = vpop.f32.mrb[0].mxu0
        %v1295 = vadd.f32 0.0, %v1294
        %v1296 = vpop.f32.mrb[0].mxu0
        %v1297 = vadd.f32 0.0, %v1296
        %1298 = vdwg.mxu0
        %v1299 = vlaneseq
        %v1300 = vshrl.u32 %v1299, 7
        %v1301 = vsub.s32 0, %v1300
        %v1302 = vrot.slane %v1295, %v1301
        %v1303 = vlaneseq
        %v1304 = vshrl.u32 %v1303, 7
        %v1305 = vsub.s32 0, %v1304
        %v1306 = vrot.slane %v1297, %v1305
        %v1307 = vsub.f32 %v1131, %v1302
        %v1308 = vsub.f32 %v1133, %v1306
        %v1309 = vsub.f32 %v1137, %v1302
        %v1310 = vsub.f32 %v1139, %v1306
        %v1311 = vmul.f32 %v1307, %v1307
        %v1312 = vmul.f32 %v1308, %v1308
        %v1313 = vmul.f32 %v1309, %v1309
        %v1314 = vmul.f32 %v1310, %v1310
        %v1315 = vadd.f32 %v1311, %v1313
        %v1316 = vrot.slane %v1315, 4
        %v1317 = vadd.f32 %v1315, %v1316
        %v1318 = vrot.slane %v1317, 2
        %v1319 = vadd.f32 %v1317, %v1318
        %v1320 = vrot.slane %v1319, 1
        %v1321 = vadd.f32 %v1319, %v1320
        %v1322 = vadd.f32 %v1312, %v1314
        %v1323 = vrot.slane %v1322, 4
        %v1324 = vadd.f32 %v1322, %v1323
        %v1325 = vrot.slane %v1324, 2
        %v1326 = vadd.f32 %v1324, %v1325
        %v1327 = vrot.slane %v1326, 1
        %v1328 = vadd.f32 %v1326, %v1327
        %1329 = vmatprep.subr.mxu0 0.0
        %1330 = vmatpush1.msra.mxu0 %v279
        %1331 = vmatprep.subr.mxu0 0.0
        %1332 = vmatpush1.msra.mxu0 %v280
        %1333 = vmatprep.subr.mxu0 0.0
        %1334 = vmatpush1.msra.mxu0 %v281
        %1335 = vmatprep.subr.mxu0 0.0
        %1336 = vmatpush1.msra.mxu0 %v282
        %1337 = vmatprep.subr.mxu0 0.0
        %1338 = vmatpush1.msra.mxu0 %v283
        %1339 = vmatprep.subr.mxu0 0.0
        %1340 = vmatpush1.msra.mxu0 %v284
        %1341 = vmatprep.subr.mxu0 0.0
        %1342 = vmatpush1.msra.mxu0 %v285
        %1343 = vmatprep.subr.mxu0 0.0
        %1344 = vmatpush1.msra.mxu0 %v286
        %1345 = vmatprep.subr.mxu0 0.0
        %1346 = vmatpush1.msra.mxu0 %v287
        %1347 = vmatprep.subr.mxu0 0.0
        %1348 = vmatpush1.msra.mxu0 %v288
        %1349 = vmatprep.subr.mxu0 0.0
        %1350 = vmatpush1.msra.mxu0 %v289
        %1351 = vmatprep.subr.mxu0 0.0
        %1352 = vmatpush1.msra.mxu0 %v290
        %1353 = vmatprep.subr.mxu0 0.0
        %1354 = vmatpush1.msra.mxu0 %v291
        %1355 = vmatprep.subr.mxu0 0.0
        %1356 = vmatpush1.msra.mxu0 %v292
        %1357 = vmatprep.subr.mxu0 0.0
        %1358 = vmatpush1.msra.mxu0 %v293
        %1359 = vmatprep.subr.mxu0 0.0
        %1360 = vmatpush1.msra.mxu0 %v294
        %1361 = vmatprep.subr.mxu0 0.0
        %1362 = vmatpush1.msra.mxu0 %v295
        %1363 = vmatprep.subr.mxu0 0.0
        %1364 = vmatpush1.msra.mxu0 %v296
        %1365 = vmatprep.subr.mxu0 0.0
        %1366 = vmatpush1.msra.mxu0 %v297
        %1367 = vmatprep.subr.mxu0 0.0
        %1368 = vmatpush1.msra.mxu0 %v298
        %1369 = vmatprep.subr.mxu0 0.0
        %1370 = vmatpush1.msra.mxu0 %v299
        %1371 = vmatprep.subr.mxu0 0.0
        %1372 = vmatpush1.msra.mxu0 %v300
        %1373 = vmatprep.subr.mxu0 0.0
        %1374 = vmatpush1.msra.mxu0 %v301
        %1375 = vmatprep.subr.mxu0 0.0
        %1376 = vmatpush1.msra.mxu0 %v302
        %1377 = vmatprep.subr.mxu0 0.0
        %1378 = vmatpush1.msra.mxu0 %v303
        %1379 = vmatprep.subr.mxu0 0.0
        %1380 = vmatpush1.msra.mxu0 %v304
        %1381 = vmatprep.subr.mxu0 0.0
        %1382 = vmatpush1.msra.mxu0 %v305
        %1383 = vmatprep.subr.mxu0 0.0
        %1384 = vmatpush1.msra.mxu0 %v306
        %1385 = vmatprep.subr.mxu0 0.0
        %1386 = vmatpush1.msra.mxu0 %v307
        %1387 = vmatprep.subr.mxu0 0.0
        %1388 = vmatpush1.msra.mxu0 %v308
        %1389 = vmatprep.subr.mxu0 0.0
        %1390 = vmatpush1.msra.mxu0 %v309
        %1391 = vmatprep.subr.mxu0 0.0
        %1392 = vmatpush1.msra.mxu0 %v310
        %1393 = vmatprep.mubr.f32.mxu0 %v1328
        %1394 = vmatmul.mubr.f32.gmra.mrb[0].mxu0 %v1321
        %v1395 = vpop.f32.mrb[0].mxu0
        %v1396 = vadd.f32 0.0, %v1395
        %v1397 = vpop.f32.mrb[0].mxu0
        %1398 = vdwg.mxu0
        %v1400 = vsel %vm399, %v1396, 0
        %1402 = vmatprep.subr.mxu0 %v312
        %1403 = vmatpush1.msra.mxu0 %v311
        %1404 = vmatprep.subr.mxu0 0.0
        %1405 = vmatpush1.msra.mxu0 0.0
        %1406 = vmatprep.subr.mxu0 0.0
        %1407 = vmatpush1.msra.mxu0 0.0
        %1408 = vmatprep.subr.mxu0 0.0
        %1409 = vmatpush1.msra.mxu0 0.0
        %1410 = vmatprep.subr.mxu0 0.0
        %1411 = vmatpush1.msra.mxu0 0.0
        %1412 = vmatprep.subr.mxu0 0.0
        %1413 = vmatpush1.msra.mxu0 0.0
        %1414 = vmatprep.subr.mxu0 0.0
        %1415 = vmatpush1.msra.mxu0 0.0
        %1416 = vmatprep.subr.mxu0 0.0
        %1417 = vmatpush1.msra.mxu0 0.0
        %1418 = vmatprep.subr.mxu0 0.0
        %1419 = vmatpush1.msra.mxu0 0.0
        %1420 = vmatprep.subr.mxu0 0.0
        %1421 = vmatpush1.msra.mxu0 0.0
        %1422 = vmatprep.subr.mxu0 0.0
        %1423 = vmatpush1.msra.mxu0 0.0
        %1424 = vmatprep.subr.mxu0 0.0
        %1425 = vmatpush1.msra.mxu0 0.0
        %1426 = vmatprep.subr.mxu0 0.0
        %1427 = vmatpush1.msra.mxu0 0.0
        %1428 = vmatprep.subr.mxu0 0.0
        %1429 = vmatpush1.msra.mxu0 0.0
        %1430 = vmatprep.subr.mxu0 0.0
        %1431 = vmatpush1.msra.mxu0 0.0
        %1432 = vmatprep.subr.mxu0 0.0
        %1433 = vmatpush1.msra.mxu0 0.0
        %1434 = vmatprep.subr.mxu0 0.0
        %1435 = vmatpush1.msra.mxu0 0.0
        %1436 = vmatprep.subr.mxu0 0.0
        %1437 = vmatpush1.msra.mxu0 0.0
        %1438 = vmatprep.subr.mxu0 0.0
        %1439 = vmatpush1.msra.mxu0 0.0
        %1440 = vmatprep.subr.mxu0 0.0
        %1441 = vmatpush1.msra.mxu0 0.0
        %1442 = vmatprep.subr.mxu0 0.0
        %1443 = vmatpush1.msra.mxu0 0.0
        %1444 = vmatprep.subr.mxu0 0.0
        %1445 = vmatpush1.msra.mxu0 0.0
        %1446 = vmatprep.subr.mxu0 0.0
        %1447 = vmatpush1.msra.mxu0 0.0
        %1448 = vmatprep.subr.mxu0 0.0
        %1449 = vmatpush1.msra.mxu0 0.0
        %1450 = vmatprep.subr.mxu0 0.0
        %1451 = vmatpush1.msra.mxu0 0.0
        %1452 = vmatprep.subr.mxu0 0.0
        %1453 = vmatpush1.msra.mxu0 0.0
        %1454 = vmatprep.subr.mxu0 0.0
        %1455 = vmatpush1.msra.mxu0 0.0
        %1456 = vmatprep.subr.mxu0 0.0
        %1457 = vmatpush1.msra.mxu0 0.0
        %1458 = vmatprep.subr.mxu0 0.0
        %1459 = vmatpush1.msra.mxu0 0.0
        %1460 = vmatprep.subr.mxu0 0.0
        %1461 = vmatpush1.msra.mxu0 0.0
        %1462 = vmatprep.subr.mxu0 0.0
        %1463 = vmatpush1.msra.mxu0 0.0
        %1464 = vmatprep.subr.mxu0 0.0
        %1465 = vmatpush1.msra.mxu0 0.0
        %1466 = vmatprep.mubr.f32.mxu0 0.0
        %1467 = vmatmul.mubr.f32.gmra.mrb[0].mxu0 %v1400
        %v1468 = vpop.f32.mrb[0].mxu0
        %v1469 = vadd.f32 1e-05, %v1468
        %v1470 = vpop.f32.mrb[0].mxu0
        %v1471 = vadd.f32 1e-05, %v1470
        %1472 = vdwg.mxu0
        %v1473 = vrsqrt.pop %v1469
        %v1474 = vrsqrt.pop %v1471
        %v1477 = vrot.slane %v313, 3
        %v1478 = vrot.slane %v314, 3
        %v1481 = vmul.f32 %v1473, %v1477
        %v1482 = vmul.f32 %v1474, %v1478
        %v1483 = vlaneseq
        %v1484 = vshrl.u32 %v1483, 7
        %v1485 = vsub.s32 0, %v1484
        %v1486 = vrot.slane %v1481, %v1485
        %v1487 = vlaneseq
        %v1488 = vshrl.u32 %v1487, 7
        %v1489 = vsub.s32 0, %v1488
        %v1490 = vrot.slane %v1482, %v1489
        %v1491 = vmul.f32 %v1307, %v1486
        %v1492 = vmul.f32 %v1308, %v1490
        %v1493 = vmul.f32 %v1309, %v1486
        %v1494 = vmul.f32 %v1310, %v1490
        %v1495 = vlaneseq
        %v1496 = vshrl.u32 %v1495, 7
        %v1497 = vsub.s32 4, %v1496
        %v1498 = vrot.slane %v313, %v1497
        %v1499 = vlaneseq
        %v1500 = vshrl.u32 %v1499, 7
        %v1501 = vsub.s32 4, %v1500
        %v1502 = vrot.slane %v314, %v1501
        %v1503 = vadd.f32 %v1491, %v1498
        %v1504 = vadd.f32 %v1492, %v1502
        %v1505 = vadd.f32 %v1493, %v1498
        %v1506 = vadd.f32 %v1494, %v1502
        %v1507 = vmax.f32 %v1503, 0.0
        %v1508 = vmax.f32 %v1504, 0.0
        %v1509 = vmax.f32 %v1505, 0.0
        %v1510 = vmax.f32 %v1506, 0.0
        %v1515 = vrot.slane %v1507, 7
        %v1516 = vrot.slane %v1508, 7
        %v1517 = vrot.slane %v1509, 7
        %v1518 = vsel %vm684, %v1515, %v1517
        %v1519 = vrot.slane %v1510, 7
        %v1520 = vsel %vm684, %v1516, %v1519
        %v1525 = vsel %vm684, 0.0, %v1515
        %v1526 = vsel %vm684, 0.0, %v1516
        %v1527 = vrot.slane %v1507, 1
        %v1528 = vrot.slane %v1509, 1
        %v1529 = vsel %vm697, %v1527, %v1528
        %v1530 = vrot.slane %v1508, 1
        %v1531 = vrot.slane %v1510, 1
        %v1532 = vsel %vm697, %v1530, %v1531
        %v1537 = vsel %vm697, %v1528, 0.0
        %v1538 = vsel %vm697, %v1531, 0.0
        %v1539 = vld [vmem:[#allocation2] sm:$0xff]
        %v1540 = vld [vmem:[#allocation2 + $0x8] sm:$0xff]
        %v1541 = vld [vmem:[#allocation2 + $0x10] sm:$0xff]
        %v1542 = vld [vmem:[#allocation2 + $0x18] sm:$0xff]
        %v1543 = vld [vmem:[#allocation2 + $0x20] sm:$0xff]
        %v1544 = vld [vmem:[#allocation2 + $0x28] sm:$0xff]
        %v1545 = vld [vmem:[#allocation2 + $0x30] sm:$0xff]
        %v1546 = vld [vmem:[#allocation2 + $0x38] sm:$0xff]
        %v1547 = vld [vmem:[#allocation2 + $0x40] sm:$0xff]
        %v1548 = vld [vmem:[#allocation2 + $0x48] sm:$0xff]
        %v1549 = vld [vmem:[#allocation2 + $0x50] sm:$0xff]
        %v1550 = vld [vmem:[#allocation2 + $0x58] sm:$0xff]
        %v1551 = vld [vmem:[#allocation2 + $0x60] sm:$0xff]
        %v1552 = vld [vmem:[#allocation2 + $0x68] sm:$0xff]
        %v1553 = vld [vmem:[#allocation2 + $0x70] sm:$0xff]
        %v1554 = vld [vmem:[#allocation2 + $0x78] sm:$0xff]
        %v1555 = vld [vmem:[#allocation2 + $0x80] sm:$0xff]
        %v1556 = vld [vmem:[#allocation2 + $0x88] sm:$0xff]
        %v1557 = vld [vmem:[#allocation2 + $0x90] sm:$0xff]
        %v1558 = vld [vmem:[#allocation2 + $0x98] sm:$0xff]
        %v1559 = vld [vmem:[#allocation2 + $0xa0] sm:$0xff]
        %v1560 = vld [vmem:[#allocation2 + $0xa8] sm:$0xff]
        %v1561 = vld [vmem:[#allocation2 + $0xb0] sm:$0xff]
        %v1562 = vld [vmem:[#allocation2 + $0xb8] sm:$0xff]
        %v1563 = vld [vmem:[#allocation2 + $0xc0] sm:$0xff]
        %v1564 = vld [vmem:[#allocation2 + $0xc8] sm:$0xff]
        %v1565 = vld [vmem:[#allocation2 + $0xd0] sm:$0xff]
        %v1566 = vld [vmem:[#allocation2 + $0xd8] sm:$0xff]
        %v1567 = vld [vmem:[#allocation2 + $0xe0] sm:$0xff]
        %v1568 = vld [vmem:[#allocation2 + $0xe8] sm:$0xff]
        %v1569 = vld [vmem:[#allocation2 + $0xf0] sm:$0xff]
        %v1570 = vld [vmem:[#allocation2 + $0xf8] sm:$0xff]
        %v1571 = vld [vmem:[#allocation2 + $0x100] sm:$0xff]
        %v1572 = vld [vmem:[#allocation2 + $0x108] sm:$0xff]
        %v1573 = vld [vmem:[#allocation2 + $0x110] sm:$0xff]
        %v1574 = vld [vmem:[#allocation2 + $0x118] sm:$0xff]
        %v1575 = vld [vmem:[#allocation2 + $0x120] sm:$0xff]
        %v1576 = vld [vmem:[#allocation2 + $0x128] sm:$0xff]
        %v1577 = vld [vmem:[#allocation2 + $0x130] sm:$0xff]
        %v1578 = vld [vmem:[#allocation2 + $0x138] sm:$0xff]
        %v1579 = vld [vmem:[#allocation2 + $0x140] sm:$0xff]
        %v1580 = vld [vmem:[#allocation2 + $0x148] sm:$0xff]
        %v1581 = vld [vmem:[#allocation2 + $0x150] sm:$0xff]
        %v1582 = vld [vmem:[#allocation2 + $0x158] sm:$0xff]
        %v1583 = vld [vmem:[#allocation2 + $0x160] sm:$0xff]
        %v1584 = vld [vmem:[#allocation2 + $0x168] sm:$0xff]
        %v1585 = vld [vmem:[#allocation2 + $0x170] sm:$0xff]
        %v1586 = vld [vmem:[#allocation2 + $0x178] sm:$0xff]
        %v1587 = vld [vmem:[#allocation2 + $0x180] sm:$0xff]
        %v1588 = vld [vmem:[#allocation2 + $0x188] sm:$0xff]
        %v1589 = vld [vmem:[#allocation2 + $0x190] sm:$0xff]
        %v1590 = vld [vmem:[#allocation2 + $0x198] sm:$0xff]
        %v1591 = vld [vmem:[#allocation2 + $0x1a0] sm:$0xff]
        %v1592 = vld [vmem:[#allocation2 + $0x1a8] sm:$0xff]
        %v1593 = vld [vmem:[#allocation2 + $0x1b0] sm:$0xff]
        %v1594 = vld [vmem:[#allocation2 + $0x1b8] sm:$0xff]
        %v1595 = vld [vmem:[#allocation2 + $0x1c0] sm:$0xff]
        %v1596 = vld [vmem:[#allocation2 + $0x1c8] sm:$0xff]
        %v1597 = vld [vmem:[#allocation2 + $0x1d0] sm:$0xff]
        %v1598 = vld [vmem:[#allocation2 + $0x1d8] sm:$0xff]
        %v1599 = vld [vmem:[#allocation2 + $0x1e0] sm:$0xff]
        %v1600 = vld [vmem:[#allocation2 + $0x1e8] sm:$0xff]
        %v1601 = vld [vmem:[#allocation2 + $0x1f0] sm:$0xff]
        %v1602 = vld [vmem:[#allocation2 + $0x1f8] sm:$0xff]
        %v1603 = vld [vmem:[#allocation2 + $0x200] sm:$0xff]
        %v1604 = vld [vmem:[#allocation2 + $0x208] sm:$0xff]
        %v1605 = vld [vmem:[#allocation2 + $0x210] sm:$0xff]
        %v1606 = vld [vmem:[#allocation2 + $0x218] sm:$0xff]
        %v1607 = vld [vmem:[#allocation2 + $0x220] sm:$0xff]
        %v1608 = vld [vmem:[#allocation2 + $0x228] sm:$0xff]
        %v1609 = vld [vmem:[#allocation2 + $0x230] sm:$0xff]
        %v1610 = vld [vmem:[#allocation2 + $0x238] sm:$0xff]
        %v1611 = vld [vmem:[#allocation2 + $0x240] sm:$0xff]
        %v1612 = vld [vmem:[#allocation2 + $0x248] sm:$0xff]
        %v1613 = vld [vmem:[#allocation2 + $0x250] sm:$0xff]
        %v1614 = vld [vmem:[#allocation2 + $0x258] sm:$0xff]
        %v1615 = vld [vmem:[#allocation2 + $0x260] sm:$0xff]
        %v1616 = vld [vmem:[#allocation2 + $0x268] sm:$0xff]
        %v1617 = vld [vmem:[#allocation2 + $0x270] sm:$0xff]
        %v1618 = vld [vmem:[#allocation2 + $0x278] sm:$0xff]
        %v1619 = vld [vmem:[#allocation2 + $0x280] sm:$0xff]
        %v1620 = vld [vmem:[#allocation2 + $0x288] sm:$0xff]
        %v1621 = vld [vmem:[#allocation2 + $0x290] sm:$0xff]
        %v1622 = vld [vmem:[#allocation2 + $0x298] sm:$0xff]
        %v1623 = vld [vmem:[#allocation2 + $0x2a0] sm:$0xff]
        %v1624 = vld [vmem:[#allocation2 + $0x2a8] sm:$0xff]
        %v1625 = vld [vmem:[#allocation2 + $0x2b0] sm:$0xff]
        %v1626 = vld [vmem:[#allocation2 + $0x2b8] sm:$0xff]
        %v1627 = vld [vmem:[#allocation2 + $0x2c0] sm:$0xff]
        %v1628 = vld [vmem:[#allocation2 + $0x2c8] sm:$0xff]
        %v1629 = vld [vmem:[#allocation2 + $0x2d0] sm:$0xff]
        %v1630 = vld [vmem:[#allocation2 + $0x2d8] sm:$0xff]
        %v1631 = vld [vmem:[#allocation2 + $0x2e0] sm:$0xff]
        %v1632 = vld [vmem:[#allocation2 + $0x2e8] sm:$0xff]
        %v1633 = vld [vmem:[#allocation2 + $0x2f0] sm:$0xff]
        %v1634 = vld [vmem:[#allocation2 + $0x2f8] sm:$0xff]
        %v1635 = vld [vmem:[#allocation2 + $0x300] sm:$0xff]
        %v1636 = vld [vmem:[#allocation2 + $0x308] sm:$0xff]
        %v1637 = vld [vmem:[#allocation2 + $0x310] sm:$0xff]
        %v1638 = vld [vmem:[#allocation2 + $0x318] sm:$0xff]
        %v1639 = vld [vmem:[#allocation2 + $0x320] sm:$0xff]
        %v1640 = vld [vmem:[#allocation2 + $0x328] sm:$0xff]
        %v1641 = vld [vmem:[#allocation2 + $0x330] sm:$0xff]
        %v1642 = vld [vmem:[#allocation2 + $0x338] sm:$0xff]
        %v1643 = vld [vmem:[#allocation2 + $0x340] sm:$0xff]
        %v1644 = vld [vmem:[#allocation2 + $0x348] sm:$0xff]
        %v1645 = vld [vmem:[#allocation2 + $0x350] sm:$0xff]
        %v1646 = vld [vmem:[#allocation2 + $0x358] sm:$0xff]
        %v1647 = vld [vmem:[#allocation2 + $0x360] sm:$0xff]
        %v1648 = vld [vmem:[#allocation2 + $0x368] sm:$0xff]
        %v1649 = vld [vmem:[#allocation2 + $0x370] sm:$0xff]
        %v1650 = vld [vmem:[#allocation2 + $0x378] sm:$0xff]
        %v1651 = vld [vmem:[#allocation2 + $0x380] sm:$0xff]
        %v1652 = vld [vmem:[#allocation2 + $0x388] sm:$0xff]
        %v1653 = vld [vmem:[#allocation2 + $0x390] sm:$0xff]
        %v1654 = vld [vmem:[#allocation2 + $0x398] sm:$0xff]
        %v1655 = vld [vmem:[#allocation2 + $0x3a0] sm:$0xff]
        %v1656 = vld [vmem:[#allocation2 + $0x3a8] sm:$0xff]
        %v1657 = vld [vmem:[#allocation2 + $0x3b0] sm:$0xff]
        %v1658 = vld [vmem:[#allocation2 + $0x3b8] sm:$0xff]
        %v1659 = vld [vmem:[#allocation2 + $0x3c0] sm:$0xff]
        %v1660 = vld [vmem:[#allocation2 + $0x3c8] sm:$0xff]
        %v1661 = vld [vmem:[#allocation2 + $0x3d0] sm:$0xff]
        %v1662 = vld [vmem:[#allocation2 + $0x3d8] sm:$0xff]
        %v1663 = vld [vmem:[#allocation2 + $0x3e0] sm:$0xff]
        %v1664 = vld [vmem:[#allocation2 + $0x3e8] sm:$0xff]
        %v1665 = vld [vmem:[#allocation2 + $0x3f0] sm:$0xff]
        %v1666 = vld [vmem:[#allocation2 + $0x3f8] sm:$0xff]
        %v1667 = vld [vmem:[#allocation2 + $0x400] sm:$0xff]
        %v1668 = vld [vmem:[#allocation2 + $0x408] sm:$0xff]
        %v1669 = vld [vmem:[#allocation2 + $0x410] sm:$0xff]
        %v1670 = vld [vmem:[#allocation2 + $0x418] sm:$0xff]
        %v1671 = vld [vmem:[#allocation2 + $0x420] sm:$0xff]
        %v1672 = vld [vmem:[#allocation2 + $0x428] sm:$0xff]
        %v1673 = vld [vmem:[#allocation2 + $0x430] sm:$0xff]
        %v1674 = vld [vmem:[#allocation2 + $0x438] sm:$0xff]
        %v1675 = vld [vmem:[#allocation2 + $0x440] sm:$0xff]
        %v1676 = vld [vmem:[#allocation2 + $0x448] sm:$0xff]
        %v1677 = vld [vmem:[#allocation2 + $0x450] sm:$0xff]
        %v1678 = vld [vmem:[#allocation2 + $0x458] sm:$0xff]
        %v1679 = vld [vmem:[#allocation2 + $0x460] sm:$0xff]
        %v1680 = vld [vmem:[#allocation2 + $0x468] sm:$0xff]
        %v1681 = vld [vmem:[#allocation2 + $0x470] sm:$0xff]
        %v1682 = vld [vmem:[#allocation2 + $0x478] sm:$0xff]
        %v1683 = vld [vmem:[#allocation2 + $0x480] sm:$0xff]
        %v1684 = vld [vmem:[#allocation2 + $0x488] sm:$0xff]
        %v1685 = vld [vmem:[#allocation2 + $0x490] sm:$0xff]
        %v1686 = vld [vmem:[#allocation2 + $0x498] sm:$0xff]
        %v1687 = vld [vmem:[#allocation2 + $0x4a0] sm:$0xff]
        %v1688 = vld [vmem:[#allocation2 + $0x4a8] sm:$0xff]
        %v1689 = vld [vmem:[#allocation2 + $0x4b0] sm:$0xff]
        %v1690 = vld [vmem:[#allocation2 + $0x4b8] sm:$0xff]
        %v1691 = vld [vmem:[#allocation2 + $0x4c0] sm:$0xff]
        %v1692 = vld [vmem:[#allocation2 + $0x4c8] sm:$0xff]
        %v1693 = vld [vmem:[#allocation2 + $0x4d0] sm:$0xff]
        %v1694 = vld [vmem:[#allocation2 + $0x4d8] sm:$0xff]
        %v1695 = vld [vmem:[#allocation2 + $0x4e0] sm:$0xff]
        %v1696 = vld [vmem:[#allocation2 + $0x4e8] sm:$0xff]
        %v1697 = vld [vmem:[#allocation2 + $0x4f0] sm:$0xff]
        %v1698 = vld [vmem:[#allocation2 + $0x4f8] sm:$0xff]
        %v1699 = vld [vmem:[#allocation2 + $0x500] sm:$0xff]
        %v1700 = vld [vmem:[#allocation2 + $0x508] sm:$0xff]
        %v1701 = vld [vmem:[#allocation2 + $0x510] sm:$0xff]
        %v1702 = vld [vmem:[#allocation2 + $0x518] sm:$0xff]
        %v1703 = vld [vmem:[#allocation2 + $0x520] sm:$0xff]
        %v1704 = vld [vmem:[#allocation2 + $0x528] sm:$0xff]
        %v1705 = vld [vmem:[#allocation2 + $0x530] sm:$0xff]
        %v1706 = vld [vmem:[#allocation2 + $0x538] sm:$0xff]
        %v1707 = vld [vmem:[#allocation2 + $0x540] sm:$0xff]
        %v1708 = vld [vmem:[#allocation2 + $0x548] sm:$0xff]
        %v1709 = vld [vmem:[#allocation2 + $0x550] sm:$0xff]
        %v1710 = vld [vmem:[#allocation2 + $0x558] sm:$0xff]
        %v1711 = vld [vmem:[#allocation2 + $0x560] sm:$0xff]
        %v1712 = vld [vmem:[#allocation2 + $0x568] sm:$0xff]
        %v1713 = vld [vmem:[#allocation2 + $0x570] sm:$0xff]
        %v1714 = vld [vmem:[#allocation2 + $0x578] sm:$0xff]
        %v1715 = vld [vmem:[#allocation2 + $0x580] sm:$0xff]
        %v1716 = vld [vmem:[#allocation2 + $0x588] sm:$0xff]
        %v1717 = vld [vmem:[#allocation2 + $0x590] sm:$0xff]
        %v1718 = vld [vmem:[#allocation2 + $0x598] sm:$0xff]
        %v1719 = vld [vmem:[#allocation2 + $0x5a0] sm:$0xff]
        %v1720 = vld [vmem:[#allocation2 + $0x5a8] sm:$0xff]
        %v1721 = vld [vmem:[#allocation2 + $0x5b0] sm:$0xff]
        %v1722 = vld [vmem:[#allocation2 + $0x5b8] sm:$0xff]
        %v1723 = vld [vmem:[#allocation2 + $0x5c0] sm:$0xff]
        %v1724 = vld [vmem:[#allocation2 + $0x5c8] sm:$0xff]
        %v1725 = vld [vmem:[#allocation2 + $0x5d0] sm:$0xff]
        %v1726 = vld [vmem:[#allocation2 + $0x5d8] sm:$0xff]
        %v1727 = vld [vmem:[#allocation2 + $0x5e0] sm:$0xff]
        %v1728 = vld [vmem:[#allocation2 + $0x5e8] sm:$0xff]
        %v1729 = vld [vmem:[#allocation2 + $0x5f0] sm:$0xff]
        %v1730 = vld [vmem:[#allocation2 + $0x5f8] sm:$0xff]
        %v1731 = vlaneseq
        %v1732 = vshrl.u32 %v1731, 7
        %v1733 = vsub.s32 5, %v1732
        %v1734 = vrot.slane %v313, %v1733
        %v1735 = vlaneseq
        %v1736 = vshrl.u32 %v1735, 7
        %v1737 = vsub.s32 5, %v1736
        %v1738 = vrot.slane %v314, %v1737
        %1739 = vmatprep.subr.mxu0 %v1540
        %1740 = vmatpush1.msra.mxu0 %v1539
        %1741 = vmatprep.subr.mxu0 %v1542
        %1742 = vmatpush1.msra.mxu0 %v1541
        %1743 = vmatprep.subr.mxu0 %v1544
        %1744 = vmatpush1.msra.mxu0 %v1543
        %1745 = vmatprep.subr.mxu0 %v1546
        %1746 = vmatpush1.msra.mxu0 %v1545
        %1747 = vmatprep.subr.mxu0 %v1548
        %1748 = vmatpush1.msra.mxu0 %v1547
        %1749 = vmatprep.subr.mxu0 %v1550
        %1750 = vmatpush1.msra.mxu0 %v1549
        %1751 = vmatprep.subr.mxu0 %v1552
        %1752 = vmatpush1.msra.mxu0 %v1551
        %1753 = vmatprep.subr.mxu0 %v1554
        %1754 = vmatpush1.msra.mxu0 %v1553
        %1755 = vmatprep.subr.mxu0 %v1556
        %1756 = vmatpush1.msra.mxu0 %v1555
        %1757 = vmatprep.subr.mxu0 %v1558
        %1758 = vmatpush1.msra.mxu0 %v1557
        %1759 = vmatprep.subr.mxu0 %v1560
        %1760 = vmatpush1.msra.mxu0 %v1559
        %1761 = vmatprep.subr.mxu0 %v1562
        %1762 = vmatpush1.msra.mxu0 %v1561
        %1763 = vmatprep.subr.mxu0 %v1564
        %1764 = vmatpush1.msra.mxu0 %v1563
        %1765 = vmatprep.subr.mxu0 %v1566
        %1766 = vmatpush1.msra.mxu0 %v1565
        %1767 = vmatprep.subr.mxu0 %v1568
        %1768 = vmatpush1.msra.mxu0 %v1567
        %1769 = vmatprep.subr.mxu0 %v1570
        %1770 = vmatpush1.msra.mxu0 %v1569
        %1771 = vmatprep.subr.mxu0 %v1572
        %1772 = vmatpush1.msra.mxu0 %v1571
        %1773 = vmatprep.subr.mxu0 %v1574
        %1774 = vmatpush1.msra.mxu0 %v1573
        %1775 = vmatprep.subr.mxu0 %v1576
        %1776 = vmatpush1.msra.mxu0 %v1575
        %1777 = vmatprep.subr.mxu0 %v1578
        %1778 = vmatpush1.msra.mxu0 %v1577
        %1779 = vmatprep.subr.mxu0 %v1580
        %1780 = vmatpush1.msra.mxu0 %v1579
        %1781 = vmatprep.subr.mxu0 %v1582
        %1782 = vmatpush1.msra.mxu0 %v1581
        %1783 = vmatprep.subr.mxu0 %v1584
        %1784 = vmatpush1.msra.mxu0 %v1583
        %1785 = vmatprep.subr.mxu0 %v1586
        %1786 = vmatpush1.msra.mxu0 %v1585
        %1787 = vmatprep.subr.mxu0 %v1588
        %1788 = vmatpush1.msra.mxu0 %v1587
        %1789 = vmatprep.subr.mxu0 %v1590
        %1790 = vmatpush1.msra.mxu0 %v1589
        %1791 = vmatprep.subr.mxu0 %v1592
        %1792 = vmatpush1.msra.mxu0 %v1591
        %1793 = vmatprep.subr.mxu0 %v1594
        %1794 = vmatpush1.msra.mxu0 %v1593
        %1795 = vmatprep.subr.mxu0 %v1596
        %1796 = vmatpush1.msra.mxu0 %v1595
        %1797 = vmatprep.subr.mxu0 %v1598
        %1798 = vmatpush1.msra.mxu0 %v1597
        %1799 = vmatprep.subr.mxu0 %v1600
        %1800 = vmatpush1.msra.mxu0 %v1599
        %1801 = vmatprep.subr.mxu0 %v1602
        %1802 = vmatpush1.msra.mxu0 %v1601
        %1803 = vmatprep.mubr.f32.mxu0 %v1526
        %1804 = vmatmul.mubr.f32.gmra.mrb[0].mxu0 %v1525
        %v1805 = vpop.f32.mrb[0].mxu0
        %v1806 = vadd.f32 %v1734, %v1805
        %v1807 = vpop.f32.mrb[0].mxu0
        %v1808 = vadd.f32 %v1738, %v1807
        %1809 = vmatprep.mubr.f32.mxu0 %v1520
        %1810 = vmatmul.mubr.f32.gmra.mrb[0].mxu0 %v1518
        %v1811 = vpop.f32.mrb[0].mxu0
        %v1812 = vadd.f32 %v1734, %v1811
        %v1813 = vpop.f32.mrb[0].mxu0
        %v1814 = vadd.f32 %v1738, %v1813
        %1815 = vdwg.mxu0
        %1816 = vmatprep.subr.mxu0 %v1604
        %1817 = vmatpush1.msra.mxu0 %v1603
        %1818 = vmatprep.subr.mxu0 %v1606
        %1819 = vmatpush1.msra.mxu0 %v1605
        %1820 = vmatprep.subr.mxu0 %v1608
        %1821 = vmatpush1.msra.mxu0 %v1607
        %1822 = vmatprep.subr.mxu0 %v1610
        %1823 = vmatpush1.msra.mxu0 %v1609
        %1824 = vmatprep.subr.mxu0 %v1612
        %1825 = vmatpush1.msra.mxu0 %v1611
        %1826 = vmatprep.subr.mxu0 %v1614
        %1827 = vmatpush1.msra.mxu0 %v1613
        %1828 = vmatprep.subr.mxu0 %v1616
        %1829 = vmatpush1.msra.mxu0 %v1615
        %1830 = vmatprep.subr.mxu0 %v1618
        %1831 = vmatpush1.msra.mxu0 %v1617
        %1832 = vmatprep.subr.mxu0 %v1620
        %1833 = vmatpush1.msra.mxu0 %v1619
        %1834 = vmatprep.subr.mxu0 %v1622
        %1835 = vmatpush1.msra.mxu0 %v1621
        %1836 = vmatprep.subr.mxu0 %v1624
        %1837 = vmatpush1.msra.mxu0 %v1623
        %1838 = vmatprep.subr.mxu0 %v1626
        %1839 = vmatpush1.msra.mxu0 %v1625
        %1840 = vmatprep.subr.mxu0 %v1628
        %1841 = vmatpush1.msra.mxu0 %v1627
        %1842 = vmatprep.subr.mxu0 %v1630
        %1843 = vmatpush1.msra.mxu0 %v1629
        %1844 = vmatprep.subr.mxu0 %v1632
        %1845 = vmatpush1.msra.mxu0 %v1631
        %1846 = vmatprep.subr.mxu0 %v1634
        %1847 = vmatpush1.msra.mxu0 %v1633
        %1848 = vmatprep.subr.mxu0 %v1636
        %1849 = vmatpush1.msra.mxu0 %v1635
        %1850 = vmatprep.subr.mxu0 %v1638
        %1851 = vmatpush1.msra.mxu0 %v1637
        %1852 = vmatprep.subr.mxu0 %v1640
        %1853 = vmatpush1.msra.mxu0 %v1639
        %1854 = vmatprep.subr.mxu0 %v1642
        %1855 = vmatpush1.msra.mxu0 %v1641
        %1856 = vmatprep.subr.mxu0 %v1644
        %1857 = vmatpush1.msra.mxu0 %v1643
        %1858 = vmatprep.subr.mxu0 %v1646
        %1859 = vmatpush1.msra.mxu0 %v1645
        %1860 = vmatprep.subr.mxu0 %v1648
        %1861 = vmatpush1.msra.mxu0 %v1647
        %1862 = vmatprep.subr.mxu0 %v1650
        %1863 = vmatpush1.msra.mxu0 %v1649
        %1864 = vmatprep.subr.mxu0 %v1652
        %1865 = vmatpush1.msra.mxu0 %v1651
        %1866 = vmatprep.subr.mxu0 %v1654
        %1867 = vmatpush1.msra.mxu0 %v1653
        %1868 = vmatprep.subr.mxu0 %v1656
        %1869 = vmatpush1.msra.mxu0 %v1655
        %1870 = vmatprep.subr.mxu0 %v1658
        %1871 = vmatpush1.msra.mxu0 %v1657
        %1872 = vmatprep.subr.mxu0 %v1660
        %1873 = vmatpush1.msra.mxu0 %v1659
        %1874 = vmatprep.subr.mxu0 %v1662
        %1875 = vmatpush1.msra.mxu0 %v1661
        %1876 = vmatprep.subr.mxu0 %v1664
        %1877 = vmatpush1.msra.mxu0 %v1663
        %1878 = vmatprep.subr.mxu0 %v1666
        %1879 = vmatpush1.msra.mxu0 %v1665
        %1880 = vmatprep.mubr.f32.mxu0 %v1508
        %1881 = vmatmul.mubr.f32.gmra.mrb[0].mxu0 %v1507
        %v1882 = vpop.f32.mrb[0].mxu0
        %v1883 = vadd.f32 %v1806, %v1882
        %v1884 = vpop.f32.mrb[0].mxu0
        %v1885 = vadd.f32 %v1808, %v1884
        %1886 = vmatprep.mubr.f32.mxu0 %v1510
        %1887 = vmatmul.mubr.f32.gmra.mrb[0].mxu0 %v1509
        %v1888 = vpop.f32.mrb[0].mxu0
        %v1889 = vadd.f32 %v1812, %v1888
        %v1890 = vpop.f32.mrb[0].mxu0
        %v1891 = vadd.f32 %v1814, %v1890
        %1892 = vdwg.mxu0
        %1893 = vmatprep.subr.mxu0 %v1668
        %1894 = vmatpush1.msra.mxu0 %v1667
        %1895 = vmatprep.subr.mxu0 %v1670
        %1896 = vmatpush1.msra.mxu0 %v1669
        %1897 = vmatprep.subr.mxu0 %v1672
        %1898 = vmatpush1.msra.mxu0 %v1671
        %1899 = vmatprep.subr.mxu0 %v1674
        %1900 = vmatpush1.msra.mxu0 %v1673
        %1901 = vmatprep.subr.mxu0 %v1676
        %1902 = vmatpush1.msra.mxu0 %v1675
        %1903 = vmatprep.subr.mxu0 %v1678
        %1904 = vmatpush1.msra.mxu0 %v1677
        %1905 = vmatprep.subr.mxu0 %v1680
        %1906 = vmatpush1.msra.mxu0 %v1679
        %1907 = vmatprep.subr.mxu0 %v1682
        %1908 = vmatpush1.msra.mxu0 %v1681
        %1909 = vmatprep.subr.mxu0 %v1684
        %1910 = vmatpush1.msra.mxu0 %v1683
        %1911 = vmatprep.subr.mxu0 %v1686
        %1912 = vmatpush1.msra.mxu0 %v1685
        %1913 = vmatprep.subr.mxu0 %v1688
        %1914 = vmatpush1.msra.mxu0 %v1687
        %1915 = vmatprep.subr.mxu0 %v1690
        %1916 = vmatpush1.msra.mxu0 %v1689
        %1917 = vmatprep.subr.mxu0 %v1692
        %1918 = vmatpush1.msra.mxu0 %v1691
        %1919 = vmatprep.subr.mxu0 %v1694
        %1920 = vmatpush1.msra.mxu0 %v1693
        %1921 = vmatprep.subr.mxu0 %v1696
        %1922 = vmatpush1.msra.mxu0 %v1695
        %1923 = vmatprep.subr.mxu0 %v1698
        %1924 = vmatpush1.msra.mxu0 %v1697
        %1925 = vmatprep.subr.mxu0 %v1700
        %1926 = vmatpush1.msra.mxu0 %v1699
        %1927 = vmatprep.subr.mxu0 %v1702
        %1928 = vmatpush1.msra.mxu0 %v1701
        %1929 = vmatprep.subr.mxu0 %v1704
        %1930 = vmatpush1.msra.mxu0 %v1703
        %1931 = vmatprep.subr.mxu0 %v1706
        %1932 = vmatpush1.msra.mxu0 %v1705
        %1933 = vmatprep.subr.mxu0 %v1708
        %1934 = vmatpush1.msra.mxu0 %v1707
        %1935 = vmatprep.subr.mxu0 %v1710
        %1936 = vmatpush1.msra.mxu0 %v1709
        %1937 = vmatprep.subr.mxu0 %v1712
        %1938 = vmatpush1.msra.mxu0 %v1711
        %1939 = vmatprep.subr.mxu0 %v1714
        %1940 = vmatpush1.msra.mxu0 %v1713
        %1941 = vmatprep.subr.mxu0 %v1716
        %1942 = vmatpush1.msra.mxu0 %v1715
        %1943 = vmatprep.subr.mxu0 %v1718
        %1944 = vmatpush1.msra.mxu0 %v1717
        %1945 = vmatprep.subr.mxu0 %v1720
        %1946 = vmatpush1.msra.mxu0 %v1719
        %1947 = vmatprep.subr.mxu0 %v1722
        %1948 = vmatpush1.msra.mxu0 %v1721
        %1949 = vmatprep.subr.mxu0 %v1724
        %1950 = vmatpush1.msra.mxu0 %v1723
        %1951 = vmatprep.subr.mxu0 %v1726
        %1952 = vmatpush1.msra.mxu0 %v1725
        %1953 = vmatprep.subr.mxu0 %v1728
        %1954 = vmatpush1.msra.mxu0 %v1727
        %1955 = vmatprep.subr.mxu0 %v1730
        %1956 = vmatpush1.msra.mxu0 %v1729
        %1957 = vmatprep.mubr.f32.mxu0 %v1532
        %1958 = vmatmul.mubr.f32.gmra.mrb[0].mxu0 %v1529
        %v1959 = vpop.f32.mrb[0].mxu0
        %v1960 = vadd.f32 %v1883, %v1959
        %v1961 = vpop.f32.mrb[0].mxu0
        %v1962 = vadd.f32 %v1885, %v1961
        %1963 = vmatprep.mubr.f32.mxu0 %v1538
        %1964 = vmatmul.mubr.f32.gmra.mrb[0].mxu0 %v1537
        %v1965 = vpop.f32.mrb[0].mxu0
        %v1966 = vadd.f32 %v1889, %v1965
        %v1967 = vpop.f32.mrb[0].mxu0
        %v1968 = vadd.f32 %v1891, %v1967
        %1969 = vdwg.mxu0
        %v1970 = vadd.f32 %v1960, %v275
        %v1971 = vadd.f32 %v1962, %v276
        %v1972 = vadd.f32 %v1966, %v277
        %v1973 = vadd.f32 %v1968, %v278
        %1974 = vst [vmem:[%s273] sm:$0xff] %v1970
        %1975 = vst [vmem:[%s273 + $0x8] sm:$0xff] %v1971
        %1976 = vst [vmem:[%s273 + $0x10] sm:$0xff] %v1972
        %1977 = vst [vmem:[%s273 + $0x18] sm:$0xff] %v1973
        %s1978 = smul.u32 2, %s18
        %p1979 = scmp.lt.s32.totalorder %s1978, 3
        %s1980 = scalar_select %p1979, %s1978, 3
        %s1981 = smul.addr %s1980, 2
        %s1982 = smul.addr %s1981, 8
        %s1983 = scalar_lea.vmem %s6, %s1982
        // Predicated region
        $region49: #{res_block_pallas.1} parent=43 // pred_check
          %p1984 = pneg %p167
        $region50: #{res_block_pallas.1} parent=43 // pred_check_branch
          %1986 = sbr.rel (%p1984) target = $region52
        $region51: #{res_block_pallas.1} parent=43 // pred_region
          %s1987 = smul.u32 2, %s18
        $region52: #{res_block_pallas.1} parent=43 // pred_fallthru
          _
      $region44: #{res_block_pallas.1} parent=5 // pred_fallthru
        _
      %p1988 = scmp.le.s32.totalorder 2, %s13
      // Predicated region
      $region53: #{res_block_pallas.1} parent=5 // pred_check
        %p1989 = pneg %p1988
      $region54: #{res_block_pallas.1} parent=5 // pred_check_branch
        %1991 = sbr.rel (%p1989) target = $region56
      $region55: #{res_block_pallas.1} parent=5 // pred_region
        %s1992 = ssub.s32 %s13, 2
        // Predicated region
        $region57: #{res_block_pallas.1} parent=55 // pred_check
          %p1993 = pneg %p173
        $region58: #{res_block_pallas.1} parent=55 // pred_check_branch
          %1995 = sbr.rel (%p1993) target = $region60
        $region59: #{res_block_pallas.1} parent=55 // pred_region
          %s1996 = smul.u32 2, %s19
          %p1997 = scmp.lt.s32.totalorder %s1996, 3
          %s1998 = scalar_select %p1997, %s1996, 3
          %s1999 = smul.addr %s1998, 2
          %s2000 = smul.addr %s1999, 8
          %s2001 = scalar_lea.vmem %s6, %s2000
        $region60: #{res_block_pallas.1} parent=55 // pred_fallthru
          _
      $region56: #{res_block_pallas.1} parent=5 // pred_fallthru
        _
    $region6: #{res_block_pallas.1} parent=1 // loop_footer
      %s17 = sadd.s32 1, %s13
    $region7: #{res_block_pallas.1} parent=1 // loop_footer_branch
      %12 = sbr.rel target = $region3
    $region8: #{res_block_pallas.1} parent=1 // loop_exit
      _
    %2002 = vsyncpa [#allocation3], 1
    %s2003 = scalar_lea.sflag [#allocation3], 1
    %2004 = vsyncpa %s2003, 1

</llo_original>
